<compile_context>
chip_gen: v6e
topology: v6e:2x2x1
jax: 0.10.0
libtpu: 0.0.40
codegen_flags: <defaults>
</compile_context>

<pallas_src>
import math

import jax
import jax.numpy as jnp
from jax.experimental import pallas as pl
from jax.experimental.pallas import tpu as pltpu


def _round_up(x, m):
    return (x + m - 1) // m * m


def _pick_d_tile(d128, dt_cap):
    """Largest 128-multiple divisor of d128 <= dt_cap; else pad D up to DT."""
    best = 128
    for cand in range(min(dt_cap, d128), 127, -128):
        if d128 % cand == 0:
            best = cand
            break
    if best >= min(512, dt_cap, d128):
        return best, d128
    dt = min(dt_cap, d128)
    return dt, _round_up(d128, dt)


def _vmem_estimate(blocks, scratch_bytes=0, margin=4 << 20):
    """blocks: list of (shape, dtype). Conservative: 2 buffers per operand."""
    total = scratch_bytes + margin
    for shape, dtype in blocks:
        total += 2 * math.prod(shape) * jnp.dtype(dtype).itemsize
    # Floor keeps compiler-internal scratch happy; cap leaves headroom on v7x
    # only when the estimate itself is small (demo sizes -> 32 MiB).
    return min(max(total, 32 << 20), 96 << 20)


# ----------------------------------------------------------------------------
# Kernels
# ----------------------------------------------------------------------------
def _fused_kernel(x_ref, eps_ref, w_e1_ref, b_e1_ref, w_head_ref, b_head_ref,
                  w_d1_ref, b_d1_ref, w_d2_ref, b_d2_ref, lat_ref, xhat_ref):
    """Whole VAE forward for one batch tile; every weight is VMEM-resident."""
    zp = eps_ref.shape[-1]
    # encoder q_z  (bf16 x bf16 -> f32 accumulation on the MXU)
    h = jnp.dot(x_ref[...], w_e1_ref[...], preferred_element_type=jnp.float32)
    h = jnp.maximum(h + b_e1_ref[...], 0.0)                              # f32
    head = jnp.dot(h.astype(jnp.bfloat16), w_head_ref[...],              # mu|lv
                   preferred_element_type=jnp.float32) + b_head_ref[...]
    z_mu = head[:, :zp]
    z_lv = head[:, zp:]
    # reparameterize (f32 elementwise)
    z = z_mu + jnp.exp(0.5 * z_lv) * eps_ref[...]
    # lane-dense packed latent output: [mu | logvar | z]
    lat_ref[:, :zp] = z_mu
    lat_ref[:, zp:2 * zp] = z_lv
    lat_ref[:, 2 * zp:] = z
    # decoder p_x
    h2 = jnp.dot(z.astype(jnp.bfloat16), w_d1_ref[...],
                 preferred_element_type=jnp.float32) + b_d1_ref[...]
    h2 = jnp.maximum(h2, 0.0).astype(jnp.bfloat16)
    logits = jnp.dot(h2, w_d2_ref[...],
                     preferred_element_type=jnp.float32) + b_d2_ref[...]
    xhat_ref[...] = jax.nn.sigmoid(logits).astype(xhat_ref.dtype)        # bf16


def _encoder_streamed_kernel(x_ref, eps_ref, w_e1_ref, b_e1_ref, w_head_ref,
                             b_head_ref, w_d1_ref, b_d1_ref,
                             lat_ref, h2_ref, h_acc_ref):
    """Grid (batch_tiles, D_tiles). D is a reduction into h_acc (f32 VMEM).
    Epilogue also computes h2 (bf16) so the decoder has no carried state."""
    d = pl.program_id(1)

    @pl.when(d == 0)
    def _():
        h_acc_ref[...] = jnp.zeros_like(h_acc_ref)

    h_acc_ref[...] += jnp.dot(x_ref[...], w_e1_ref[...],
                              preferred_element_type=jnp.float32)

    @pl.when(d == pl.num_programs(1) - 1)
    def _():
        zp = eps_ref.shape[-1]
        h = jnp.maximum(h_acc_ref[...] + b_e1_ref[...], 0.0)
        head = jnp.dot(h.astype(jnp.bfloat16), w_head_ref[...],
                       preferred_element_type=jnp.float32) + b_head_ref[...]
        z_mu = head[:, :zp]
        z_lv = head[:, zp:]
        z = z_mu + jnp.exp(0.5 * z_lv) * eps_ref[...]
        lat_ref[:, :zp] = z_mu
        lat_ref[:, zp:2 * zp] = z_lv
        lat_ref[:, 2 * zp:] = z
        h2 = jnp.dot(z.astype(jnp.bfloat16), w_d1_ref[...],
                     preferred_element_type=jnp.float32) + b_d1_ref[...]
        h2_ref[...] = jnp.maximum(h2, 0.0).astype(h2_ref.dtype)          # bf16


def _decoder_streamed_kernel(h2_ref, w_d2_ref, b_d2_ref, xhat_ref):
    """Grid (batch_tiles, D_out_tiles); both axes independent ('parallel')."""
    logits = jnp.dot(h2_ref[...], w_d2_ref[...],
                     preferred_element_type=jnp.float32) + b_d2_ref[...]
    xhat_ref[...] = jax.nn.sigmoid(logits).astype(xhat_ref.dtype)        # bf16


# ----------------------------------------------------------------------------
# Wrapper
# ----------------------------------------------------------------------------
def vae_forward(x_nchw, params, eps, *, dt_max=1024, bm_max=256,
                force_streamed=False, fused_vmem_budget=44 << 20):
    """x_nchw: (B, C, H, W) f32. Returns dict matching the torch forward()."""
    f32, bf16 = jnp.float32, jnp.bfloat16
    B, C, H, W = x_nchw.shape
    D = C * H * W
    Z = params["w_mu"].shape[1]
    HID = params["w_e1"].shape[1]

    # Padded / tiled sizes (batch tile rounded to 16 sublanes for bf16 tiles).
    bm_cap = max(16, (bm_max // 16) * 16)
    BM = min(bm_cap, _round_up(B, 16))
    B_pad = _round_up(B, BM)
    ZP = _round_up(Z, 128)
    HIDP = _round_up(HID, 128)
    nb = B_pad // BM

    def pad2(a, rows, cols, dtype):
        out = jnp.zeros((rows, cols), f32).at[:a.shape[0], :a.shape[1]].set(
            a.astype(f32))
        return out.astype(dtype)

    # ---- decide: fused (weights fully VMEM-resident) vs streamed ----
    D_full = _round_up(D, 128)
    fused_blocks = [
        ((BM, D_full), bf16), ((BM, ZP), f32),
        ((D_full, HIDP), bf16), ((1, HIDP), f32),
        ((HIDP, 2 * ZP), bf16), ((1, 2 * ZP), f32),
        ((ZP, HIDP), bf16), ((1, HIDP), f32),
        ((HIDP, D_full), bf16), ((1, D_full), f32),
        ((BM, 3 * ZP), f32), ((BM, D_full), bf16),
    ]
    fused_need = sum(2 * math.prod(s) * jnp.dtype(d).itemsize
                     for s, d in fused_blocks) + (4 << 20)
    use_fused = (not force_streamed) and (fused_need <= fused_vmem_budget)

    if use_fused:
        D_pad = D_full
    else:
        dt_cap = max(128, _round_up(dt_max, 128))
        DT, D_pad = _pick_d_tile(D_full, dt_cap)
        nd = D_pad // DT

    # Inputs: x as bf16 (halves DMA), eps stays f32 (elementwise only).
    x_p = pad2(x_nchw.reshape(B, D), B_pad, D_pad, bf16)
    eps_p = pad2(eps, B_pad, ZP, f32)

    # Parameters: bf16 weights, f32 biases; mu/lv head fused along lanes.
    w_e1 = pad2(params["w_e1"], D_pad, HIDP, bf16)
    b_e1 = pad2(params["b_e1"], 1, HIDP, f32)
    w_head = jnp.concatenate(
        [pad2(params["w_mu"], HIDP, ZP, f32),
         pad2(params["w_lv"], HIDP, ZP, f32)], axis=1).astype(bf16)
    b_head = jnp.concatenate(
        [pad2(params["b_mu"], 1, ZP, f32),
         pad2(params["b_lv"], 1, ZP, f32)], axis=1)
    w_d1 = pad2(params["w_d1"], ZP, HIDP, bf16)
    b_d1 = pad2(params["b_d1"], 1, HIDP, f32)
    w_d2 = pad2(params["w_d2"], HIDP, D_pad, bf16)
    b_d2 = pad2(params["b_d2"], 1, D_pad, f32)

    if use_fused:
        # -------- single fused launch, grid over batch tiles only --------
        lat, x_hat_p = pl.pallas_call(
            _fused_kernel,
            grid=(nb,),
            in_specs=[
                pl.BlockSpec((BM, D_pad), lambda b: (b, 0)),      # x
                pl.BlockSpec((BM, ZP), lambda b: (b, 0)),         # eps
                pl.BlockSpec((D_pad, HIDP), lambda b: (0, 0)),    # w_e1
                pl.BlockSpec((1, HIDP), lambda b: (0, 0)),        # b_e1
                pl.BlockSpec((HIDP, 2 * ZP), lambda b: (0, 0)),   # w_head
                pl.BlockSpec((1, 2 * ZP), lambda b: (0, 0)),      # b_head
                pl.BlockSpec((ZP, HIDP), lambda b: (0, 0)),       # w_d1
                pl.BlockSpec((1, HIDP), lambda b: (0, 0)),        # b_d1
                pl.BlockSpec((HIDP, D_pad), lambda b: (0, 0)),    # w_d2
                pl.BlockSpec((1, D_pad), lambda b: (0, 0)),       # b_d2
            ],
            out_specs=[
                pl.BlockSpec((BM, 3 * ZP), lambda b: (b, 0)),     # packed latents
                pl.BlockSpec((BM, D_pad), lambda b: (b, 0)),      # x_hat (bf16)
            ],
            out_shape=[jax.ShapeDtypeStruct((B_pad, 3 * ZP), f32),
                       jax.ShapeDtypeStruct((B_pad, D_pad), bf16)],
            compiler_params=pltpu.CompilerParams(
                dimension_semantics=("parallel",),
                vmem_limit_bytes=_vmem_estimate(fused_blocks)),
        )(x_p, eps_p, w_e1, b_e1, w_head, b_head, w_d1, b_d1, w_d2, b_d2)
    else:
        # -------- streamed path: encoder (reduction over D) --------
        enc_blocks = [
            ((BM, DT), bf16), ((BM, ZP), f32),
            ((DT, HIDP), bf16), ((1, HIDP), f32),
            ((HIDP, 2 * ZP), bf16), ((1, 2 * ZP), f32),
            ((ZP, HIDP), bf16), ((1, HIDP), f32),
            ((BM, 3 * ZP), f32), ((BM, HIDP), bf16),
        ]
        lat, h2 = pl.pallas_call(
            _encoder_streamed_kernel,
            grid=(nb, nd),
            in_specs=[
                pl.BlockSpec((BM, DT), lambda b, d: (b, d)),          # x tile
                pl.BlockSpec((BM, ZP), lambda b, d: (b, 0)),          # eps
                pl.BlockSpec((DT, HIDP), lambda b, d: (d, 0)),        # w_e1 tile
                pl.BlockSpec((1, HIDP), lambda b, d: (0, 0)),         # b_e1
                pl.BlockSpec((HIDP, 2 * ZP), lambda b, d: (0, 0)),    # w_head
                pl.BlockSpec((1, 2 * ZP), lambda b, d: (0, 0)),       # b_head
                pl.BlockSpec((ZP, HIDP), lambda b, d: (0, 0)),        # w_d1
                pl.BlockSpec((1, HIDP), lambda b, d: (0, 0)),         # b_d1
            ],
            out_specs=[
                pl.BlockSpec((BM, 3 * ZP), lambda b, d: (b, 0)),      # latents
                pl.BlockSpec((BM, HIDP), lambda b, d: (b, 0)),        # h2 (bf16)
            ],
            out_shape=[jax.ShapeDtypeStruct((B_pad, 3 * ZP), f32),
                       jax.ShapeDtypeStruct((B_pad, HIDP), bf16)],
            scratch_shapes=[pltpu.VMEM((BM, HIDP), f32)],             # h accum
            compiler_params=pltpu.CompilerParams(
                dimension_semantics=("parallel", "arbitrary"),
                vmem_limit_bytes=_vmem_estimate(
                    enc_blocks, scratch_bytes=BM * HIDP * 4)),
        )(x_p, eps_p, w_e1, b_e1, w_head, b_head, w_d1, b_d1)

        # -------- streamed path: decoder output matmul (both axes parallel) --------
        dec_blocks = [
            ((BM, HIDP), bf16), ((HIDP, DT), bf16), ((1, DT), f32),
            ((BM, DT), bf16),
        ]
        x_hat_p = pl.pallas_call(
            _decoder_streamed_kernel,
            grid=(nb, nd),
            in_specs=[
                pl.BlockSpec((BM, HIDP), lambda b, d: (b, 0)),        # h2
                pl.BlockSpec((HIDP, DT), lambda b, d: (0, d)),        # w_d2 tile
                pl.BlockSpec((1, DT), lambda b, d: (0, d)),           # b_d2 tile
            ],
            out_specs=pl.BlockSpec((BM, DT), lambda b, d: (b, d)),
            out_shape=jax.ShapeDtypeStruct((B_pad, D_pad), bf16),
            compiler_params=pltpu.CompilerParams(
                dimension_semantics=("parallel", "parallel"),
                vmem_limit_bytes=_vmem_estimate(dec_blocks)),
        )(h2, w_d2, b_d2)

    z_mu = lat[:B, 0:Z]
    z_lv = lat[:B, ZP:ZP + Z]
    z_q = lat[:B, 2 * ZP:2 * ZP + Z]
    x_hat = x_hat_p[:B, :D].astype(f32).reshape(B, C, H, W)
    return {"z_q": z_q, "z_q_mean": z_mu, "z_q_logvar": z_lv, "x_hat": x_hat}


# ----------------------------------------------------------------------------
# Pure-JAX reference (same bf16-weight / f32-accumulate math) for validation.
# ----------------------------------------------------------------------------
def vae_reference(x_nchw, params, eps):
    bf16 = jnp.bfloat16
    B = x_nchw.shape[0]
    x = x_nchw.reshape(B, -1).astype(bf16)
    h = jnp.maximum(
        jnp.dot(x, params["w_e1"].astype(bf16),
                preferred_element_type=jnp.float32) + params["b_e1"], 0.0)
    hb = h.astype(bf16)
    z_mu = jnp.dot(hb, params["w_mu"].astype(bf16),
                   preferred_element_type=jnp.float32) + params["b_mu"]
    z_lv = jnp.dot(hb, params["w_lv"].astype(bf16),
                   preferred_element_type=jnp.float32) + params["b_lv"]
    z = z_mu + jnp.exp(0.5 * z_lv) * eps
    h2 = jnp.maximum(
        jnp.dot(z.astype(bf16), params["w_d1"].astype(bf16),
                preferred_element_type=jnp.float32) + params["b_d1"], 0.0)
    logits = jnp.dot(h2.astype(bf16), params["w_d2"].astype(bf16),
                     preferred_element_type=jnp.float32) + params["b_d2"]
    x_hat = jax.nn.sigmoid(logits).reshape(x_nchw.shape)
    return {"z_q": z, "z_q_mean": z_mu, "z_q_logvar": z_lv, "x_hat": x_hat}


def init_params(key, flat_x_dim, hidden_dim, z_dim):
    ks = jax.random.split(key, 6)

    def dense(k, fan_in, fan_out):
        scale = (2.0 / fan_in) ** 0.5
        return scale * jax.random.normal(k, (fan_in, fan_out), dtype=jnp.float32)

    return {
        # encoder q_z
        "w_e1": dense(ks[0], flat_x_dim, hidden_dim),
        "b_e1": jnp.zeros((1, hidden_dim), jnp.float32),
        "w_mu": dense(ks[1], hidden_dim, z_dim),
        "b_mu": jnp.zeros((1, z_dim), jnp.float32),
        "w_lv": dense(ks[2], hidden_dim, z_dim),
        "b_lv": jnp.zeros((1, z_dim), jnp.float32),
        # decoder p_x
        "w_d1": dense(ks[3], z_dim, hidden_dim),
        "b_d1": jnp.zeros((1, hidden_dim), jnp.float32),
        "w_d2": dense(ks[4], hidden_dim, flat_x_dim),
        "b_d2": jnp.zeros((1, flat_x_dim), jnp.float32),
    }


if __name__ == "__main__":
    B, C, H, W = 2, 4, 16, 16          # small NCHW input
    Z_DIM = 32
    HIDDEN = 256
    D = C * H * W

    key = jax.random.PRNGKey(0)
    k_x, k_eps, k_par = jax.random.split(key, 3)

    x = jax.random.uniform(k_x, (B, C, H, W), dtype=jnp.float32)
    eps = jax.random.normal(k_eps, (B, Z_DIM), dtype=jnp.float32)
    params = init_params(k_par, D, HIDDEN, Z_DIM)

    ref = vae_reference(x, params, eps)

    # Default: fused single-launch path (weights VMEM-resident).
    out_fused = jax.block_until_ready(vae_forward(x, params, eps))
    # Also exercise the streamed fallback path (multi-tile D reduction).
    out_streamed = jax.block_until_ready(
        vae_forward(x, params, eps, force_streamed=True, dt_max=256, bm_max=16))

    tols = (("z_q_mean", 5e-3), ("z_q_logvar", 5e-3), ("z_q", 5e-3),
            ("x_hat", 1e-2))
    for out in (out_fused, out_streamed):
        # shape sanity (matches the torch module's forward() outputs)
        assert out["z_q"].shape == (B, Z_DIM)
        assert out["z_q_mean"].shape == (B, Z_DIM)
        assert out["z_q_logvar"].shape == (B, Z_DIM)
        assert out["x_hat"].shape == (B, C, H, W)
        # numerical sanity vs. the pure-JAX reference using the same bf16 math
        for name, tol in tols:
            err = float(jnp.max(jnp.abs(out[name] - ref[name])))
            assert err < tol, f"{name} max abs err {err}"
        assert bool(jnp.all(jnp.isfinite(out["x_hat"])))

    print("KERNEL_OK")
</pallas_src>

<mosaic_0001>
module attributes {stable_mosaic.version = 11 : i64} {
  func.func @_fused_kernel(%arg0: i32, %arg1: memref<16x1024xbf16, #tpu.memory_space<vmem>>, %arg2: memref<16x128xf32, #tpu.memory_space<vmem>>, %arg3: memref<1024x256xbf16, #tpu.memory_space<vmem>>, %arg4: memref<1x256xf32, #tpu.memory_space<vmem>>, %arg5: memref<256x256xbf16, #tpu.memory_space<vmem>>, %arg6: memref<1x256xf32, #tpu.memory_space<vmem>>, %arg7: memref<128x256xbf16, #tpu.memory_space<vmem>>, %arg8: memref<1x256xf32, #tpu.memory_space<vmem>>, %arg9: memref<256x1024xbf16, #tpu.memory_space<vmem>>, %arg10: memref<1x1024xf32, #tpu.memory_space<vmem>>, %arg11: memref<16x384xf32, #tpu.memory_space<vmem>>, %arg12: memref<16x1024xbf16, #tpu.memory_space<vmem>>) attributes {dimension_semantics = [#tpu.dimension_semantics<parallel>], iteration_bounds = array<i64: 1>, scalar_prefetch = 0 : i64, scratch_operands = 0 : i64, tpu.core_type = #tpu.core_type<tc>, window_params = [{transform_indices = @transform_0, window_bounds = array<i64: 16, 1024>}, {transform_indices = @transform_1, window_bounds = array<i64: 16, 128>}, {pipeline_mode = #tpu.pipeline_mode<synchronous>, transform_indices = @transform_2, window_bounds = array<i64: 1024, 256>}, {pipeline_mode = #tpu.pipeline_mode<synchronous>, transform_indices = @transform_3, window_bounds = array<i64: 1, 256>}, {pipeline_mode = #tpu.pipeline_mode<synchronous>, transform_indices = @transform_4, window_bounds = array<i64: 256, 256>}, {pipeline_mode = #tpu.pipeline_mode<synchronous>, transform_indices = @transform_5, window_bounds = array<i64: 1, 256>}, {pipeline_mode = #tpu.pipeline_mode<synchronous>, transform_indices = @transform_6, window_bounds = array<i64: 128, 256>}, {pipeline_mode = #tpu.pipeline_mode<synchronous>, transform_indices = @transform_7, window_bounds = array<i64: 1, 256>}, {pipeline_mode = #tpu.pipeline_mode<synchronous>, transform_indices = @transform_8, window_bounds = array<i64: 256, 1024>}, {pipeline_mode = #tpu.pipeline_mode<synchronous>, transform_indices = @transform_9, window_bounds = array<i64: 1, 1024>}, {transform_indices = @transform_10, window_bounds = array<i64: 16, 384>}, {transform_indices = @transform_11, window_bounds = array<i64: 16, 1024>}]} {
    %c0 = arith.constant 0 : index
    %c0_0 = arith.constant 0 : index
    %0 = vector.load %arg1[%c0, %c0_0] : memref<16x1024xbf16, #tpu.memory_space<vmem>>, vector<16x1024xbf16>
    %c0_1 = arith.constant 0 : index
    %c0_2 = arith.constant 0 : index
    %1 = vector.load %arg3[%c0_1, %c0_2] : memref<1024x256xbf16, #tpu.memory_space<vmem>>, vector<1024x256xbf16>
    %cst = arith.constant dense<0.000000e+00> : vector<16x256xf32>
    %2 = tpu.matmul %0, %1, %cst {dimension_numbers = #tpu.dot_dimension_numbers<[1], [0], [0], [1], [0, 0, 1, 1], [], []>} : vector<16x1024xbf16>, vector<1024x256xbf16>, vector<16x256xf32> -> vector<16x256xf32>
    %c0_3 = arith.constant 0 : index
    %c0_4 = arith.constant 0 : index
    %3 = vector.load %arg4[%c0_3, %c0_4] : memref<1x256xf32, #tpu.memory_space<vmem>>, vector<1x256xf32>
    %4 = vector.broadcast %3 : vector<1x256xf32> to vector<16x256xf32>
    %5 = arith.addf %2, %4 : vector<16x256xf32>
    %cst_5 = arith.constant 0.000000e+00 : f32
    %6 = vector.broadcast %cst_5 : f32 to vector<16x256xf32>
    %7 = arith.maximumf %5, %6 : vector<16x256xf32>
    %8 = arith.truncf %7 : vector<16x256xf32> to vector<16x256xbf16>
    %c0_6 = arith.constant 0 : index
    %c0_7 = arith.constant 0 : index
    %9 = vector.load %arg5[%c0_6, %c0_7] : memref<256x256xbf16, #tpu.memory_space<vmem>>, vector<256x256xbf16>
    %cst_8 = arith.constant dense<0.000000e+00> : vector<16x256xf32>
    %10 = tpu.matmul %8, %9, %cst_8 {dimension_numbers = #tpu.dot_dimension_numbers<[1], [0], [0], [1], [0, 0, 1, 1], [], []>} : vector<16x256xbf16>, vector<256x256xbf16>, vector<16x256xf32> -> vector<16x256xf32>
    %c0_9 = arith.constant 0 : index
    %c0_10 = arith.constant 0 : index
    %11 = vector.load %arg6[%c0_9, %c0_10] : memref<1x256xf32, #tpu.memory_space<vmem>>, vector<1x256xf32>
    %12 = vector.broadcast %11 : vector<1x256xf32> to vector<16x256xf32>
    %13 = arith.addf %10, %12 : vector<16x256xf32>
    %14 = vector.extract_strided_slice %13 {offsets = [0, 0], sizes = [16, 128], strides = [1, 1]} : vector<16x256xf32> to vector<16x128xf32>
    %15 = vector.extract_strided_slice %13 {offsets = [0, 128], sizes = [16, 128], strides = [1, 1]} : vector<16x256xf32> to vector<16x128xf32>
    %cst_11 = arith.constant 5.000000e-01 : f32
    %16 = vector.broadcast %cst_11 : f32 to vector<16x128xf32>
    %17 = arith.mulf %16, %15 : vector<16x128xf32>
    %18 = math.exp %17 : vector<16x128xf32>
    %c0_12 = arith.constant 0 : index
    %c0_13 = arith.constant 0 : index
    %19 = vector.load %arg2[%c0_12, %c0_13] : memref<16x128xf32, #tpu.memory_space<vmem>>, vector<16x128xf32>
    %20 = arith.mulf %18, %19 : vector<16x128xf32>
    %21 = arith.addf %14, %20 : vector<16x128xf32>
    %c0_14 = arith.constant 0 : index
    %c0_15 = arith.constant 0 : index
    %22 = vector.load %arg11[%c0_14, %c0_15] : memref<16x384xf32, #tpu.memory_space<vmem>>, vector<16x128xf32>
    tpu.vector_store %arg11[%c0_14, %c0_15], %14 {strides = array<i32>} : memref<16x384xf32, #tpu.memory_space<vmem>>, vector<16x128xf32>,
    %c0_16 = arith.constant 0 : index
    %c128 = arith.constant 128 : index
    %23 = vector.load %arg11[%c0_16, %c128] : memref<16x384xf32, #tpu.memory_space<vmem>>, vector<16x128xf32>
    tpu.vector_store %arg11[%c0_16, %c128], %15 {strides = array<i32>} : memref<16x384xf32, #tpu.memory_space<vmem>>, vector<16x128xf32>,
    %c0_17 = arith.constant 0 : index
    %c256 = arith.constant 256 : index
    %24 = vector.load %arg11[%c0_17, %c256] : memref<16x384xf32, #tpu.memory_space<vmem>>, vector<16x128xf32>
    tpu.vector_store %arg11[%c0_17, %c256], %21 {strides = array<i32>} : memref<16x384xf32, #tpu.memory_space<vmem>>, vector<16x128xf32>,
    %25 = arith.truncf %21 : vector<16x128xf32> to vector<16x128xbf16>
    %c0_18 = arith.constant 0 : index
    %c0_19 = arith.constant 0 : index
    %26 = vector.load %arg7[%c0_18, %c0_19] : memref<128x256xbf16, #tpu.memory_space<vmem>>, vector<128x256xbf16>
    %cst_20 = arith.constant dense<0.000000e+00> : vector<16x256xf32>
    %27 = tpu.matmul %25, %26, %cst_20 {dimension_numbers = #tpu.dot_dimension_numbers<[1], [0], [0], [1], [0, 0, 1, 1], [], []>} : vector<16x128xbf16>, vector<128x256xbf16>, vector<16x256xf32> -> vector<16x256xf32>
    %c0_21 = arith.constant 0 : index
    %c0_22 = arith.constant 0 : index
    %28 = vector.load %arg8[%c0_21, %c0_22] : memref<1x256xf32, #tpu.memory_space<vmem>>, vector<1x256xf32>
    %29 = vector.broadcast %28 : vector<1x256xf32> to vector<16x256xf32>
    %30 = arith.addf %27, %29 : vector<16x256xf32>
    %cst_23 = arith.constant 0.000000e+00 : f32
    %31 = vector.broadcast %cst_23 : f32 to vector<16x256xf32>
    %32 = arith.maximumf %30, %31 : vector<16x256xf32>
    %33 = arith.truncf %32 : vector<16x256xf32> to vector<16x256xbf16>
    %c0_24 = arith.constant 0 : index
    %c0_25 = arith.constant 0 : index
    %34 = vector.load %arg9[%c0_24, %c0_25] : memref<256x1024xbf16, #tpu.memory_space<vmem>>, vector<256x1024xbf16>
    %cst_26 = arith.constant dense<0.000000e+00> : vector<16x1024xf32>
    %35 = tpu.matmul %33, %34, %cst_26 {dimension_numbers = #tpu.dot_dimension_numbers<[1], [0], [0], [1], [0, 0, 1, 1], [], []>} : vector<16x256xbf16>, vector<256x1024xbf16>, vector<16x1024xf32> -> vector<16x1024xf32>
    %c0_27 = arith.constant 0 : index
    %c0_28 = arith.constant 0 : index
    %36 = vector.load %arg10[%c0_27, %c0_28] : memref<1x1024xf32, #tpu.memory_space<vmem>>, vector<1x1024xf32>
    %37 = vector.broadcast %36 : vector<1x1024xf32> to vector<16x1024xf32>
    %38 = arith.addf %35, %37 : vector<16x1024xf32>
    %39 = arith.negf %38 : vector<16x1024xf32>
    %40 = math.exp %39 : vector<16x1024xf32>
    %cst_29 = arith.constant 1.000000e+00 : f32
    %41 = vector.broadcast %cst_29 : f32 to vector<16x1024xf32>
    %42 = arith.addf %41, %40 : vector<16x1024xf32>
    %43 = arith.divf %41, %42 : vector<16x1024xf32>
    %44 = arith.truncf %43 : vector<16x1024xf32> to vector<16x1024xbf16>
    %c0_30 = arith.constant 0 : index
    %c0_31 = arith.constant 0 : index
    %45 = vector.load %arg12[%c0_30, %c0_31] : memref<16x1024xbf16, #tpu.memory_space<vmem>>, vector<16x1024xbf16>
    tpu.vector_store %arg12[%c0_30, %c0_31], %44 {strides = array<i32>} : memref<16x1024xbf16, #tpu.memory_space<vmem>>, vector<16x1024xbf16>,
    return
  }
  func.func @transform_0(%arg0: i32) -> (i32, i32) {
    %c0_i32 = arith.constant 0 : i32
    %c0_i32_0 = arith.constant 0 : i32
    return %arg0, %c0_i32 : i32, i32
  }
  func.func @transform_1(%arg0: i32) -> (i32, i32) {
    %c0_i32 = arith.constant 0 : i32
    %c0_i32_0 = arith.constant 0 : i32
    return %arg0, %c0_i32 : i32, i32
  }
  func.func @transform_2(%arg0: i32) -> (i32, i32) {
    %c0_i32 = arith.constant 0 : i32
    %c0_i32_0 = arith.constant 0 : i32
    %c0_i32_1 = arith.constant 0 : i32
    return %c0_i32, %c0_i32_0 : i32, i32
  }
  func.func @transform_3(%arg0: i32) -> (i32, i32) {
    %c0_i32 = arith.constant 0 : i32
    %c0_i32_0 = arith.constant 0 : i32
    %c0_i32_1 = arith.constant 0 : i32
    return %c0_i32, %c0_i32_0 : i32, i32
  }
  func.func @transform_4(%arg0: i32) -> (i32, i32) {
    %c0_i32 = arith.constant 0 : i32
    %c0_i32_0 = arith.constant 0 : i32
    %c0_i32_1 = arith.constant 0 : i32
    return %c0_i32, %c0_i32_0 : i32, i32
  }
  func.func @transform_5(%arg0: i32) -> (i32, i32) {
    %c0_i32 = arith.constant 0 : i32
    %c0_i32_0 = arith.constant 0 : i32
    %c0_i32_1 = arith.constant 0 : i32
    return %c0_i32, %c0_i32_0 : i32, i32
  }
  func.func @transform_6(%arg0: i32) -> (i32, i32) {
    %c0_i32 = arith.constant 0 : i32
    %c0_i32_0 = arith.constant 0 : i32
    %c0_i32_1 = arith.constant 0 : i32
    return %c0_i32, %c0_i32_0 : i32, i32
  }
  func.func @transform_7(%arg0: i32) -> (i32, i32) {
    %c0_i32 = arith.constant 0 : i32
    %c0_i32_0 = arith.constant 0 : i32
    %c0_i32_1 = arith.constant 0 : i32
    return %c0_i32, %c0_i32_0 : i32, i32
  }
  func.func @transform_8(%arg0: i32) -> (i32, i32) {
    %c0_i32 = arith.constant 0 : i32
    %c0_i32_0 = arith.constant 0 : i32
    %c0_i32_1 = arith.constant 0 : i32
    return %c0_i32, %c0_i32_0 : i32, i32
  }
  func.func @transform_9(%arg0: i32) -> (i32, i32) {
    %c0_i32 = arith.constant 0 : i32
    %c0_i32_0 = arith.constant 0 : i32
    %c0_i32_1 = arith.constant 0 : i32
    return %c0_i32, %c0_i32_0 : i32, i32
  }
  func.func @transform_10(%arg0: i32) -> (i32, i32) {
    %c0_i32 = arith.constant 0 : i32
    %c0_i32_0 = arith.constant 0 : i32
    return %arg0, %c0_i32 : i32, i32
  }
  func.func @transform_11(%arg0: i32) -> (i32, i32) {
    %c0_i32 = arith.constant 0 : i32
    %c0_i32_0 = arith.constant 0 : i32
    return %arg0, %c0_i32 : i32, i32
  }
}

</mosaic_0001>

<llo_original>
// kernel: tpu_custom_call.1
$region0: #{tpu_custom_call.1}
  #allocation0 [shape = 'u32[]', space=smem, size = 0x4, offset = 0x4, fixed_abs, tag = 'smem constant byte address 0x4 - core index']
  #allocation1 [shape = 'u32[144,128]{1,0:T(1,128)}', space=vmem, size = 0x12000, scoped, tag = 'internal scratch']
  %s0 = inlined_call_operand.hbm [shape: bf16[16,1024], index: 0, kind: input, shape index: {}]
  %s1 = inlined_call_operand.hbm [shape: f32[16,128], index: 1, kind: input, shape index: {}]
  %s2 = inlined_call_operand.hbm [shape: bf16[1024,256], index: 2, kind: input, shape index: {}]
  %s3 = inlined_call_operand.vmem [shape: f32[1,256], index: 3, kind: input, shape index: {}]
  %s4 = inlined_call_operand.hbm [shape: bf16[256,256], index: 4, kind: input, shape index: {}]
  %s5 = inlined_call_operand.vmem [shape: f32[1,256], index: 5, kind: input, shape index: {}]
  %s6 = inlined_call_operand.hbm [shape: bf16[128,256], index: 6, kind: input, shape index: {}]
  %s7 = inlined_call_operand.vmem [shape: f32[1,256], index: 7, kind: input, shape index: {}]
  %s8 = inlined_call_operand.hbm [shape: bf16[256,1024], index: 8, kind: input, shape index: {}]
  %s9 = inlined_call_operand.vmem [shape: f32[1,1024], index: 9, kind: input, shape index: {}]
  %s10 = inlined_call_operand.hbm [shape: f32[16,384], index: 10, kind: output, shape index: {0}]
  %s11 = inlined_call_operand.hbm [shape: bf16[16,1024], index: 11, kind: output, shape index: {1}]
  %12 = xla_tuple %s10, %s11
  %s13 = sld [smem:[#allocation0]]
  $region82: #{tpu_custom_call.1} parent=0
    _
  %s15 = ssub.s32 1, %s13
  %s16 = scalar_select 0, %s15, %s13
  $region1: #{tpu_custom_call.1} parent=0
    #allocation2 [shape = 'u8[32768]{0}', space=vmem, size = 0x8000, scoped, tag = 'input window, operand 0, single buffered']
    #allocation3 [shape = 's32[1]{0}', space=sflag, size = 0x4, scoped, tag = 'scoped memory for tpu_custom_call.1']
    #allocation4 [shape = 's32[1]{0}', space=sflag, size = 0x4, scoped, tag = 'scoped memory for tpu_custom_call.1']
    #allocation5 [shape = 'u8[8192]{0}', space=vmem, size = 0x2000, scoped, tag = 'input window, operand 1, single buffered']
    #allocation6 [shape = 's32[1]{0}', space=sflag, size = 0x4, scoped, tag = 'scoped memory for tpu_custom_call.1']
    #allocation7 [shape = 'u8[524288]{0}', space=vmem, size = 0x80000, scoped, tag = 'input window, operand 2, single buffered']
    #allocation8 [shape = 'u8[131072]{0}', space=vmem, size = 0x20000, scoped, tag = 'input window, operand 4, single buffered']
    #allocation9 [shape = 's32[1]{0}', space=sflag, size = 0x4, scoped, tag = 'scoped memory for tpu_custom_call.1']
    #allocation10 [shape = 'u8[65536]{0}', space=vmem, size = 0x10000, scoped, tag = 'input window, operand 6, single buffered']
    #allocation11 [shape = 'u8[524288]{0}', space=vmem, size = 0x80000, scoped, tag = 'input window, operand 8, single buffered']
    #allocation12 [shape = 's32[1]{0}', space=sflag, size = 0x4, scoped, tag = 'scoped memory for tpu_custom_call.1']
    #allocation13 [shape = 'u8[24576]{0}', space=vmem, size = 0x6000, scoped, tag = 'output window, operand 0, single buffered']
    #allocation14 [shape = 'u8[32768]{0}', space=vmem, size = 0x8000, scoped, tag = 'output window, operand 1, single buffered']
    #allocation15 [shape = 's32[1]{0}', space=sflag, size = 0x4, scoped, tag = 'scoped memory for tpu_custom_call.1']
    %17 = vsyncpa [#allocation3], 0
    %18 = vsyncpa [#allocation6], 0
    %19 = vsyncpa [#allocation9], 0
    %20 = vsyncpa [#allocation12], 0
    %21 = vsyncpa [#allocation4], 0
    %22 = vsyncpa [#allocation15], 0
    // Predicated region
    $region2: #{tpu_custom_call.1} parent=1 // pred_check
      _
    $region3: #{tpu_custom_call.1} parent=1 // pred_check_branch
      %24 = sbr.rel (0) target = $region5
    $region4: #{tpu_custom_call.1} parent=1 // pred_region
      %s26 = ssub.s32 1024, 1024
      %27 = vsyncadd [#allocation3], %s26
      %s28 = sshll.u32 [#allocation2], 4
      %s29 = int_to_ptr.vmem [resolvable:$true] %s28
      %34 = dma.hbm_to_vmem [thread:$0]  %s0, 1024, %s29, [#allocation3], 512, 512, 32
    $region5: #{tpu_custom_call.1} parent=1 // pred_fallthru
      _
    // Predicated region
    $region6: #{tpu_custom_call.1} parent=1 // pred_check
      _
    $region7: #{tpu_custom_call.1} parent=1 // pred_check_branch
      %36 = sbr.rel (0) target = $region9
    $region8: #{tpu_custom_call.1} parent=1 // pred_region
      %s38 = ssub.s32 256, 256
      %39 = vsyncadd [#allocation6], %s38
      %s40 = sshll.u32 [#allocation5], 4
      %s41 = int_to_ptr.vmem [resolvable:$true] %s40
      %46 = dma.hbm_to_vmem [thread:$0]  %s1, 256, %s41, [#allocation6], 128, 128, 8
    $region9: #{tpu_custom_call.1} parent=1 // pred_fallthru
      _
    // Predicated region
    $region10: #{tpu_custom_call.1} parent=1 // pred_check
      _
    $region11: #{tpu_custom_call.1} parent=1 // pred_check_branch
      %48 = sbr.rel (0) target = $region13
    $region12: #{tpu_custom_call.1} parent=1 // pred_region
      %s50 = ssub.s32 16384, 16384
      %51 = vsyncadd [#allocation6], %s50
      %s52 = sshll.u32 [#allocation7], 4
      %s53 = int_to_ptr.vmem [resolvable:$true] %s52
      %58 = dma.hbm_to_vmem [thread:$0]  %s2, 16384, %s53, [#allocation6], 128, 128, 8
    $region13: #{tpu_custom_call.1} parent=1 // pred_fallthru
      _
    // Predicated region
    $region14: #{tpu_custom_call.1} parent=1 // pred_check
      _
    $region15: #{tpu_custom_call.1} parent=1 // pred_check_branch
      %60 = sbr.rel (0) target = $region17
    $region16: #{tpu_custom_call.1} parent=1 // pred_region
      _
    $region17: #{tpu_custom_call.1} parent=1 // pred_fallthru
      _
    // Predicated region
    $region18: #{tpu_custom_call.1} parent=1 // pred_check
      _
    $region19: #{tpu_custom_call.1} parent=1 // pred_check_branch
      %62 = sbr.rel (0) target = $region21
    $region20: #{tpu_custom_call.1} parent=1 // pred_region
      %s64 = ssub.s32 4096, 4096
      %65 = vsyncadd [#allocation9], %s64
      %s66 = sshll.u32 [#allocation8], 4
      %s67 = int_to_ptr.vmem [resolvable:$true] %s66
      %72 = dma.hbm_to_vmem [thread:$0]  %s4, 4096, %s67, [#allocation9], 128, 128, 8
    $region21: #{tpu_custom_call.1} parent=1 // pred_fallthru
      _
    // Predicated region
    $region22: #{tpu_custom_call.1} parent=1 // pred_check
      _
    $region23: #{tpu_custom_call.1} parent=1 // pred_check_branch
      %74 = sbr.rel (0) target = $region25
    $region24: #{tpu_custom_call.1} parent=1 // pred_region
      _
    $region25: #{tpu_custom_call.1} parent=1 // pred_fallthru
      _
    // Predicated region
    $region26: #{tpu_custom_call.1} parent=1 // pred_check
      _
    $region27: #{tpu_custom_call.1} parent=1 // pred_check_branch
      %76 = sbr.rel (0) target = $region29
    $region28: #{tpu_custom_call.1} parent=1 // pred_region
      %s78 = ssub.s32 2048, 2048
      %79 = vsyncadd [#allocation9], %s78
      %s80 = sshll.u32 [#allocation10], 4
      %s81 = int_to_ptr.vmem [resolvable:$true] %s80
      %86 = dma.hbm_to_vmem [thread:$0]  %s6, 2048, %s81, [#allocation9], 128, 128, 8
    $region29: #{tpu_custom_call.1} parent=1 // pred_fallthru
      _
    // Predicated region
    $region30: #{tpu_custom_call.1} parent=1 // pred_check
      _
    $region31: #{tpu_custom_call.1} parent=1 // pred_check_branch
      %88 = sbr.rel (0) target = $region33
    $region32: #{tpu_custom_call.1} parent=1 // pred_region
      _
    $region33: #{tpu_custom_call.1} parent=1 // pred_fallthru
      _
    // Predicated region
    $region34: #{tpu_custom_call.1} parent=1 // pred_check
      _
    $region35: #{tpu_custom_call.1} parent=1 // pred_check_branch
      %90 = sbr.rel (0) target = $region37
    $region36: #{tpu_custom_call.1} parent=1 // pred_region
      %s92 = ssub.s32 16384, 16384
      %93 = vsyncadd [#allocation12], %s92
      %s94 = sshll.u32 [#allocation11], 4
      %s95 = int_to_ptr.vmem [resolvable:$true] %s94
      %100 = dma.hbm_to_vmem [thread:$0]  %s8, 16384, %s95, [#allocation12], 512, 512, 32
    $region37: #{tpu_custom_call.1} parent=1 // pred_fallthru
      _
    // Predicated region
    $region38: #{tpu_custom_call.1} parent=1 // pred_check
      _
    $region39: #{tpu_custom_call.1} parent=1 // pred_check_branch
      %102 = sbr.rel (0) target = $region41
    $region40: #{tpu_custom_call.1} parent=1 // pred_region
      _
    $region41: #{tpu_custom_call.1} parent=1 // pred_fallthru
      _
    // Predicated region
    $region42: #{tpu_custom_call.1} parent=1 // pred_check
      _
    $region43: #{tpu_custom_call.1} parent=1 // pred_check_branch
      %104 = sbr.rel (0) target = $region45
    $region44: #{tpu_custom_call.1} parent=1 // pred_region
      %105 = dma.done [#allocation3], 1024
    $region45: #{tpu_custom_call.1} parent=1 // pred_fallthru
      _
    // Predicated region
    $region46: #{tpu_custom_call.1} parent=1 // pred_check
      _
    $region47: #{tpu_custom_call.1} parent=1 // pred_check_branch
      %107 = sbr.rel (0) target = $region49
    $region48: #{tpu_custom_call.1} parent=1 // pred_region
      %108 = dma.done [#allocation6], 256
    $region49: #{tpu_custom_call.1} parent=1 // pred_fallthru
      _
    // Predicated region
    $region50: #{tpu_custom_call.1} parent=1 // pred_check
      _
    $region51: #{tpu_custom_call.1} parent=1 // pred_check_branch
      %110 = sbr.rel (0) target = $region53
    $region52: #{tpu_custom_call.1} parent=1 // pred_region
      %111 = dma.done [#allocation6], 16384
    $region53: #{tpu_custom_call.1} parent=1 // pred_fallthru
      _
    // Predicated region
    $region54: #{tpu_custom_call.1} parent=1 // pred_check
      _
    $region55: #{tpu_custom_call.1} parent=1 // pred_check_branch
      %113 = sbr.rel (0) target = $region57
    $region56: #{tpu_custom_call.1} parent=1 // pred_region
      %114 = dma.done [#allocation9], 4096
    $region57: #{tpu_custom_call.1} parent=1 // pred_fallthru
      _
    // Predicated region
    $region58: #{tpu_custom_call.1} parent=1 // pred_check
      _
    $region59: #{tpu_custom_call.1} parent=1 // pred_check_branch
      %116 = sbr.rel (0) target = $region61
    $region60: #{tpu_custom_call.1} parent=1 // pred_region
      %117 = dma.done [#allocation9], 2048
    $region61: #{tpu_custom_call.1} parent=1 // pred_fallthru
      _
    // Predicated region
    $region62: #{tpu_custom_call.1} parent=1 // pred_check
      _
    $region63: #{tpu_custom_call.1} parent=1 // pred_check_branch
      %119 = sbr.rel (0) target = $region65
    $region64: #{tpu_custom_call.1} parent=1 // pred_region
      %120 = dma.done [#allocation12], 16384
    $region65: #{tpu_custom_call.1} parent=1 // pred_fallthru
      _
    %v122 = vld [vmem:[#allocation2] sm:$0xff]
    %v123 = vld [vmem:[#allocation2 + $0x8] sm:$0xff]
    %v124 = vld [vmem:[#allocation2 + $0x10] sm:$0xff]
    %v125 = vld [vmem:[#allocation2 + $0x18] sm:$0xff]
    %v126 = vld [vmem:[#allocation2 + $0x20] sm:$0xff]
    %v127 = vld [vmem:[#allocation2 + $0x28] sm:$0xff]
    %v128 = vld [vmem:[#allocation2 + $0x30] sm:$0xff]
    %v129 = vld [vmem:[#allocation2 + $0x38] sm:$0xff]
    %v130 = vld [vmem:[#allocation7] sm:$0xff]
    %v131 = vld [vmem:[#allocation7 + $0x8] sm:$0xff]
    %v132 = vld [vmem:[#allocation7 + $0x10] sm:$0xff]
    %v133 = vld [vmem:[#allocation7 + $0x18] sm:$0xff]
    %v134 = vld [vmem:[#allocation7 + $0x20] sm:$0xff]
    %v135 = vld [vmem:[#allocation7 + $0x28] sm:$0xff]
    %v136 = vld [vmem:[#allocation7 + $0x30] sm:$0xff]
    %v137 = vld [vmem:[#allocation7 + $0x38] sm:$0xff]
    %v138 = vld [vmem:[#allocation7 + $0x40] sm:$0xff]
    %v139 = vld [vmem:[#allocation7 + $0x48] sm:$0xff]
    %v140 = vld [vmem:[#allocation7 + $0x50] sm:$0xff]
    %v141 = vld [vmem:[#allocation7 + $0x58] sm:$0xff]
    %v142 = vld [vmem:[#allocation7 + $0x60] sm:$0xff]
    %v143 = vld [vmem:[#allocation7 + $0x68] sm:$0xff]
    %v144 = vld [vmem:[#allocation7 + $0x70] sm:$0xff]
    %v145 = vld [vmem:[#allocation7 + $0x78] sm:$0xff]
    %v146 = vld [vmem:[#allocation7 + $0x80] sm:$0xff]
    %v147 = vld [vmem:[#allocation7 + $0x88] sm:$0xff]
    %v148 = vld [vmem:[#allocation7 + $0x90] sm:$0xff]
    %v149 = vld [vmem:[#allocation7 + $0x98] sm:$0xff]
    %v150 = vld [vmem:[#allocation7 + $0xa0] sm:$0xff]
    %v151 = vld [vmem:[#allocation7 + $0xa8] sm:$0xff]
    %v152 = vld [vmem:[#allocation7 + $0xb0] sm:$0xff]
    %v153 = vld [vmem:[#allocation7 + $0xb8] sm:$0xff]
    %v154 = vld [vmem:[#allocation7 + $0xc0] sm:$0xff]
    %v155 = vld [vmem:[#allocation7 + $0xc8] sm:$0xff]
    %v156 = vld [vmem:[#allocation7 + $0xd0] sm:$0xff]
    %v157 = vld [vmem:[#allocation7 + $0xd8] sm:$0xff]
    %v158 = vld [vmem:[#allocation7 + $0xe0] sm:$0xff]
    %v159 = vld [vmem:[#allocation7 + $0xe8] sm:$0xff]
    %v160 = vld [vmem:[#allocation7 + $0xf0] sm:$0xff]
    %v161 = vld [vmem:[#allocation7 + $0xf8] sm:$0xff]
    %v162 = vld [vmem:[#allocation7 + $0x100] sm:$0xff]
    %v163 = vld [vmem:[#allocation7 + $0x108] sm:$0xff]
    %v164 = vld [vmem:[#allocation7 + $0x110] sm:$0xff]
    %v165 = vld [vmem:[#allocation7 + $0x118] sm:$0xff]
    %v166 = vld [vmem:[#allocation7 + $0x120] sm:$0xff]
    %v167 = vld [vmem:[#allocation7 + $0x128] sm:$0xff]
    %v168 = vld [vmem:[#allocation7 + $0x130] sm:$0xff]
    %v169 = vld [vmem:[#allocation7 + $0x138] sm:$0xff]
    %v170 = vld [vmem:[#allocation7 + $0x140] sm:$0xff]
    %v171 = vld [vmem:[#allocation7 + $0x148] sm:$0xff]
    %v172 = vld [vmem:[#allocation7 + $0x150] sm:$0xff]
    %v173 = vld [vmem:[#allocation7 + $0x158] sm:$0xff]
    %v174 = vld [vmem:[#allocation7 + $0x160] sm:$0xff]
    %v175 = vld [vmem:[#allocation7 + $0x168] sm:$0xff]
    %v176 = vld [vmem:[#allocation7 + $0x170] sm:$0xff]
    %v177 = vld [vmem:[#allocation7 + $0x178] sm:$0xff]
    %v178 = vld [vmem:[#allocation7 + $0x180] sm:$0xff]
    %v179 = vld [vmem:[#allocation7 + $0x188] sm:$0xff]
    %v180 = vld [vmem:[#allocation7 + $0x190] sm:$0xff]
    %v181 = vld [vmem:[#allocation7 + $0x198] sm:$0xff]
    %v182 = vld [vmem:[#allocation7 + $0x1a0] sm:$0xff]
    %v183 = vld [vmem:[#allocation7 + $0x1a8] sm:$0xff]
    %v184 = vld [vmem:[#allocation7 + $0x1b0] sm:$0xff]
    %v185 = vld [vmem:[#allocation7 + $0x1b8] sm:$0xff]
    %v186 = vld [vmem:[#allocation7 + $0x1c0] sm:$0xff]
    %v187 = vld [vmem:[#allocation7 + $0x1c8] sm:$0xff]
    %v188 = vld [vmem:[#allocation7 + $0x1d0] sm:$0xff]
    %v189 = vld [vmem:[#allocation7 + $0x1d8] sm:$0xff]
    %v190 = vld [vmem:[#allocation7 + $0x1e0] sm:$0xff]
    %v191 = vld [vmem:[#allocation7 + $0x1e8] sm:$0xff]
    %v192 = vld [vmem:[#allocation7 + $0x1f0] sm:$0xff]
    %v193 = vld [vmem:[#allocation7 + $0x1f8] sm:$0xff]
    %v194 = vld [vmem:[#allocation7 + $0x200] sm:$0xff]
    %v195 = vld [vmem:[#allocation7 + $0x208] sm:$0xff]
    %v196 = vld [vmem:[#allocation7 + $0x210] sm:$0xff]
    %v197 = vld [vmem:[#allocation7 + $0x218] sm:$0xff]
    %v198 = vld [vmem:[#allocation7 + $0x220] sm:$0xff]
    %v199 = vld [vmem:[#allocation7 + $0x228] sm:$0xff]
    %v200 = vld [vmem:[#allocation7 + $0x230] sm:$0xff]
    %v201 = vld [vmem:[#allocation7 + $0x238] sm:$0xff]
    %v202 = vld [vmem:[#allocation7 + $0x240] sm:$0xff]
    %v203 = vld [vmem:[#allocation7 + $0x248] sm:$0xff]
    %v204 = vld [vmem:[#allocation7 + $0x250] sm:$0xff]
    %v205 = vld [vmem:[#allocation7 + $0x258] sm:$0xff]
    %v206 = vld [vmem:[#allocation7 + $0x260] sm:$0xff]
    %v207 = vld [vmem:[#allocation7 + $0x268] sm:$0xff]
    %v208 = vld [vmem:[#allocation7 + $0x270] sm:$0xff]
    %v209 = vld [vmem:[#allocation7 + $0x278] sm:$0xff]
    %v210 = vld [vmem:[#allocation7 + $0x280] sm:$0xff]
    %v211 = vld [vmem:[#allocation7 + $0x288] sm:$0xff]
    %v212 = vld [vmem:[#allocation7 + $0x290] sm:$0xff]
    %v213 = vld [vmem:[#allocation7 + $0x298] sm:$0xff]
    %v214 = vld [vmem:[#allocation7 + $0x2a0] sm:$0xff]
    %v215 = vld [vmem:[#allocation7 + $0x2a8] sm:$0xff]
    %v216 = vld [vmem:[#allocation7 + $0x2b0] sm:$0xff]
    %v217 = vld [vmem:[#allocation7 + $0x2b8] sm:$0xff]
    %v218 = vld [vmem:[#allocation7 + $0x2c0] sm:$0xff]
    %v219 = vld [vmem:[#allocation7 + $0x2c8] sm:$0xff]
    %v220 = vld [vmem:[#allocation7 + $0x2d0] sm:$0xff]
    %v221 = vld [vmem:[#allocation7 + $0x2d8] sm:$0xff]
    %v222 = vld [vmem:[#allocation7 + $0x2e0] sm:$0xff]
    %v223 = vld [vmem:[#allocation7 + $0x2e8] sm:$0xff]
    %v224 = vld [vmem:[#allocation7 + $0x2f0] sm:$0xff]
    %v225 = vld [vmem:[#allocation7 + $0x2f8] sm:$0xff]
    %v226 = vld [vmem:[#allocation7 + $0x300] sm:$0xff]
    %v227 = vld [vmem:[#allocation7 + $0x308] sm:$0xff]
    %v228 = vld [vmem:[#allocation7 + $0x310] sm:$0xff]
    %v229 = vld [vmem:[#allocation7 + $0x318] sm:$0xff]
    %v230 = vld [vmem:[#allocation7 + $0x320] sm:$0xff]
    %v231 = vld [vmem:[#allocation7 + $0x328] sm:$0xff]
    %v232 = vld [vmem:[#allocation7 + $0x330] sm:$0xff]
    %v233 = vld [vmem:[#allocation7 + $0x338] sm:$0xff]
    %v234 = vld [vmem:[#allocation7 + $0x340] sm:$0xff]
    %v235 = vld [vmem:[#allocation7 + $0x348] sm:$0xff]
    %v236 = vld [vmem:[#allocation7 + $0x350] sm:$0xff]
    %v237 = vld [vmem:[#allocation7 + $0x358] sm:$0xff]
    %v238 = vld [vmem:[#allocation7 + $0x360] sm:$0xff]
    %v239 = vld [vmem:[#allocation7 + $0x368] sm:$0xff]
    %v240 = vld [vmem:[#allocation7 + $0x370] sm:$0xff]
    %v241 = vld [vmem:[#allocation7 + $0x378] sm:$0xff]
    %v242 = vld [vmem:[#allocation7 + $0x380] sm:$0xff]
    %v243 = vld [vmem:[#allocation7 + $0x388] sm:$0xff]
    %v244 = vld [vmem:[#allocation7 + $0x390] sm:$0xff]
    %v245 = vld [vmem:[#allocation7 + $0x398] sm:$0xff]
    %v246 = vld [vmem:[#allocation7 + $0x3a0] sm:$0xff]
    %v247 = vld [vmem:[#allocation7 + $0x3a8] sm:$0xff]
    %v248 = vld [vmem:[#allocation7 + $0x3b0] sm:$0xff]
    %v249 = vld [vmem:[#allocation7 + $0x3b8] sm:$0xff]
    %v250 = vld [vmem:[#allocation7 + $0x3c0] sm:$0xff]
    %v251 = vld [vmem:[#allocation7 + $0x3c8] sm:$0xff]
    %v252 = vld [vmem:[#allocation7 + $0x3d0] sm:$0xff]
    %v253 = vld [vmem:[#allocation7 + $0x3d8] sm:$0xff]
    %v254 = vld [vmem:[#allocation7 + $0x3e0] sm:$0xff]
    %v255 = vld [vmem:[#allocation7 + $0x3e8] sm:$0xff]
    %v256 = vld [vmem:[#allocation7 + $0x3f0] sm:$0xff]
    %v257 = vld [vmem:[#allocation7 + $0x3f8] sm:$0xff]
    %v258 = vld [vmem:[%s3] sm:$0x3]
    %v260 = vlaneseq
    %v261 = vshrl.u32 %v260, 7
    %v262 = vsub.s32 0, %v261
    %v263 = vrot.slane %v258, %v262
    %v264 = vlaneseq
    %v265 = vshrl.u32 %v264, 7
    %v266 = vsub.s32 1, %v265
    %v267 = vrot.slane %v258, %v266
    %v278 = vunpack.c.l.b16 %v122
    %v279 = vunpack.c.h.b16 %v122
    %v280 = vunpack.c.l.b16 %v123
    %v281 = vunpack.c.h.b16 %v123
    %v282 = vunpack.c.l.b16 %v124
    %v283 = vunpack.c.h.b16 %v124
    %v284 = vunpack.c.l.b16 %v125
    %v285 = vunpack.c.h.b16 %v125
    %v286 = vunpack.c.l.b16 %v126
    %v287 = vunpack.c.h.b16 %v126
    %v288 = vunpack.c.l.b16 %v127
    %v289 = vunpack.c.h.b16 %v127
    %v290 = vunpack.c.l.b16 %v128
    %v291 = vunpack.c.h.b16 %v128
    %v292 = vunpack.c.l.b16 %v129
    %v293 = vunpack.c.h.b16 %v129
    %v294 = vpack.c.b16 %v286, %v278
    %v295 = vpack.c.b16 %v287, %v279
    %v296 = vpack.c.b16 %v288, %v280
    %v297 = vpack.c.b16 %v289, %v281
    %v298 = vpack.c.b16 %v290, %v282
    %v299 = vpack.c.b16 %v291, %v283
    %v300 = vpack.c.b16 %v292, %v284
    %v301 = vpack.c.b16 %v293, %v285
    %v438 = vunpack.c.l.b16 %v130
    %v439 = vunpack.c.h.b16 %v130
    %v440 = vunpack.c.l.b16 %v131
    %v441 = vunpack.c.h.b16 %v131
    %v442 = vunpack.c.l.b16 %v132
    %v443 = vunpack.c.h.b16 %v132
    %v444 = vunpack.c.l.b16 %v133
    %v445 = vunpack.c.h.b16 %v133
    %v446 = vunpack.c.l.b16 %v134
    %v447 = vunpack.c.h.b16 %v134
    %v448 = vunpack.c.l.b16 %v135
    %v449 = vunpack.c.h.b16 %v135
    %v450 = vunpack.c.l.b16 %v136
    %v451 = vunpack.c.h.b16 %v136
    %v452 = vunpack.c.l.b16 %v137
    %v453 = vunpack.c.h.b16 %v137
    %v454 = vunpack.c.l.b16 %v138
    %v455 = vunpack.c.h.b16 %v138
    %v456 = vunpack.c.l.b16 %v139
    %v457 = vunpack.c.h.b16 %v139
    %v458 = vunpack.c.l.b16 %v140
    %v459 = vunpack.c.h.b16 %v140
    %v460 = vunpack.c.l.b16 %v141
    %v461 = vunpack.c.h.b16 %v141
    %v462 = vunpack.c.l.b16 %v142
    %v463 = vunpack.c.h.b16 %v142
    %v464 = vunpack.c.l.b16 %v143
    %v465 = vunpack.c.h.b16 %v143
    %v466 = vunpack.c.l.b16 %v144
    %v467 = vunpack.c.h.b16 %v144
    %v468 = vunpack.c.l.b16 %v145
    %v469 = vunpack.c.h.b16 %v145
    %v470 = vunpack.c.l.b16 %v146
    %v471 = vunpack.c.h.b16 %v146
    %v472 = vunpack.c.l.b16 %v147
    %v473 = vunpack.c.h.b16 %v147
    %v474 = vunpack.c.l.b16 %v148
    %v475 = vunpack.c.h.b16 %v148
    %v476 = vunpack.c.l.b16 %v149
    %v477 = vunpack.c.h.b16 %v149
    %v478 = vunpack.c.l.b16 %v150
    %v479 = vunpack.c.h.b16 %v150
    %v480 = vunpack.c.l.b16 %v151
    %v481 = vunpack.c.h.b16 %v151
    %v482 = vunpack.c.l.b16 %v152
    %v483 = vunpack.c.h.b16 %v152
    %v484 = vunpack.c.l.b16 %v153
    %v485 = vunpack.c.h.b16 %v153
    %v486 = vunpack.c.l.b16 %v154
    %v487 = vunpack.c.h.b16 %v154
    %v488 = vunpack.c.l.b16 %v155
    %v489 = vunpack.c.h.b16 %v155
    %v490 = vunpack.c.l.b16 %v156
    %v491 = vunpack.c.h.b16 %v156
    %v492 = vunpack.c.l.b16 %v157
    %v493 = vunpack.c.h.b16 %v157
    %v494 = vunpack.c.l.b16 %v158
    %v495 = vunpack.c.h.b16 %v158
    %v496 = vunpack.c.l.b16 %v159
    %v497 = vunpack.c.h.b16 %v159
    %v498 = vunpack.c.l.b16 %v160
    %v499 = vunpack.c.h.b16 %v160
    %v500 = vunpack.c.l.b16 %v161
    %v501 = vunpack.c.h.b16 %v161
    %v502 = vunpack.c.l.b16 %v162
    %v503 = vunpack.c.h.b16 %v162
    %v504 = vunpack.c.l.b16 %v163
    %v505 = vunpack.c.h.b16 %v163
    %v506 = vunpack.c.l.b16 %v164
    %v507 = vunpack.c.h.b16 %v164
    %v508 = vunpack.c.l.b16 %v165
    %v509 = vunpack.c.h.b16 %v165
    %v510 = vunpack.c.l.b16 %v166
    %v511 = vunpack.c.h.b16 %v166
    %v512 = vunpack.c.l.b16 %v167
    %v513 = vunpack.c.h.b16 %v167
    %v514 = vunpack.c.l.b16 %v168
    %v515 = vunpack.c.h.b16 %v168
    %v516 = vunpack.c.l.b16 %v169
    %v517 = vunpack.c.h.b16 %v169
    %v518 = vunpack.c.l.b16 %v170
    %v519 = vunpack.c.h.b16 %v170
    %v520 = vunpack.c.l.b16 %v171
    %v521 = vunpack.c.h.b16 %v171
    %v522 = vunpack.c.l.b16 %v172
    %v523 = vunpack.c.h.b16 %v172
    %v524 = vunpack.c.l.b16 %v173
    %v525 = vunpack.c.h.b16 %v173
    %v526 = vunpack.c.l.b16 %v174
    %v527 = vunpack.c.h.b16 %v174
    %v528 = vunpack.c.l.b16 %v175
    %v529 = vunpack.c.h.b16 %v175
    %v530 = vunpack.c.l.b16 %v176
    %v531 = vunpack.c.h.b16 %v176
    %v532 = vunpack.c.l.b16 %v177
    %v533 = vunpack.c.h.b16 %v177
    %v534 = vunpack.c.l.b16 %v178
    %v535 = vunpack.c.h.b16 %v178
    %v536 = vunpack.c.l.b16 %v179
    %v537 = vunpack.c.h.b16 %v179
    %v538 = vunpack.c.l.b16 %v180
    %v539 = vunpack.c.h.b16 %v180
    %v540 = vunpack.c.l.b16 %v181
    %v541 = vunpack.c.h.b16 %v181
    %v542 = vunpack.c.l.b16 %v182
    %v543 = vunpack.c.h.b16 %v182
    %v544 = vunpack.c.l.b16 %v183
    %v545 = vunpack.c.h.b16 %v183
    %v546 = vunpack.c.l.b16 %v184
    %v547 = vunpack.c.h.b16 %v184
    %v548 = vunpack.c.l.b16 %v185
    %v549 = vunpack.c.h.b16 %v185
    %v550 = vunpack.c.l.b16 %v186
    %v551 = vunpack.c.h.b16 %v186
    %v552 = vunpack.c.l.b16 %v187
    %v553 = vunpack.c.h.b16 %v187
    %v554 = vunpack.c.l.b16 %v188
    %v555 = vunpack.c.h.b16 %v188
    %v556 = vunpack.c.l.b16 %v189
    %v557 = vunpack.c.h.b16 %v189
    %v558 = vunpack.c.l.b16 %v190
    %v559 = vunpack.c.h.b16 %v190
    %v560 = vunpack.c.l.b16 %v191
    %v561 = vunpack.c.h.b16 %v191
    %v562 = vunpack.c.l.b16 %v192
    %v563 = vunpack.c.h.b16 %v192
    %v564 = vunpack.c.l.b16 %v193
    %v565 = vunpack.c.h.b16 %v193
    %v566 = vunpack.c.l.b16 %v194
    %v567 = vunpack.c.h.b16 %v194
    %v568 = vunpack.c.l.b16 %v195
    %v569 = vunpack.c.h.b16 %v195
    %v570 = vunpack.c.l.b16 %v196
    %v571 = vunpack.c.h.b16 %v196
    %v572 = vunpack.c.l.b16 %v197
    %v573 = vunpack.c.h.b16 %v197
    %v574 = vunpack.c.l.b16 %v198
    %v575 = vunpack.c.h.b16 %v198
    %v576 = vunpack.c.l.b16 %v199
    %v577 = vunpack.c.h.b16 %v199
    %v578 = vunpack.c.l.b16 %v200
    %v579 = vunpack.c.h.b16 %v200
    %v580 = vunpack.c.l.b16 %v201
    %v581 = vunpack.c.h.b16 %v201
    %v582 = vunpack.c.l.b16 %v202
    %v583 = vunpack.c.h.b16 %v202
    %v584 = vunpack.c.l.b16 %v203
    %v585 = vunpack.c.h.b16 %v203
    %v586 = vunpack.c.l.b16 %v204
    %v587 = vunpack.c.h.b16 %v204
    %v588 = vunpack.c.l.b16 %v205
    %v589 = vunpack.c.h.b16 %v205
    %v590 = vunpack.c.l.b16 %v206
    %v591 = vunpack.c.h.b16 %v206
    %v592 = vunpack.c.l.b16 %v207
    %v593 = vunpack.c.h.b16 %v207
    %v594 = vunpack.c.l.b16 %v208
    %v595 = vunpack.c.h.b16 %v208
    %v596 = vunpack.c.l.b16 %v209
    %v597 = vunpack.c.h.b16 %v209
    %v598 = vunpack.c.l.b16 %v210
    %v599 = vunpack.c.h.b16 %v210
    %v600 = vunpack.c.l.b16 %v211
    %v601 = vunpack.c.h.b16 %v211
    %v602 = vunpack.c.l.b16 %v212
    %v603 = vunpack.c.h.b16 %v212
    %v604 = vunpack.c.l.b16 %v213
    %v605 = vunpack.c.h.b16 %v213
    %v606 = vunpack.c.l.b16 %v214
    %v607 = vunpack.c.h.b16 %v214
    %v608 = vunpack.c.l.b16 %v215
    %v609 = vunpack.c.h.b16 %v215
    %v610 = vunpack.c.l.b16 %v216
    %v611 = vunpack.c.h.b16 %v216
    %v612 = vunpack.c.l.b16 %v217
    %v613 = vunpack.c.h.b16 %v217
    %v614 = vunpack.c.l.b16 %v218
    %v615 = vunpack.c.h.b16 %v218
    %v616 = vunpack.c.l.b16 %v219
    %v617 = vunpack.c.h.b16 %v219
    %v618 = vunpack.c.l.b16 %v220
    %v619 = vunpack.c.h.b16 %v220
    %v620 = vunpack.c.l.b16 %v221
    %v621 = vunpack.c.h.b16 %v221
    %v622 = vunpack.c.l.b16 %v222
    %v623 = vunpack.c.h.b16 %v222
    %v624 = vunpack.c.l.b16 %v223
    %v625 = vunpack.c.h.b16 %v223
    %v626 = vunpack.c.l.b16 %v224
    %v627 = vunpack.c.h.b16 %v224
    %v628 = vunpack.c.l.b16 %v225
    %v629 = vunpack.c.h.b16 %v225
    %v630 = vunpack.c.l.b16 %v226
    %v631 = vunpack.c.h.b16 %v226
    %v632 = vunpack.c.l.b16 %v227
    %v633 = vunpack.c.h.b16 %v227
    %v634 = vunpack.c.l.b16 %v228
    %v635 = vunpack.c.h.b16 %v228
    %v636 = vunpack.c.l.b16 %v229
    %v637 = vunpack.c.h.b16 %v229
    %v638 = vunpack.c.l.b16 %v230
    %v639 = vunpack.c.h.b16 %v230
    %v640 = vunpack.c.l.b16 %v231
    %v641 = vunpack.c.h.b16 %v231
    %v642 = vunpack.c.l.b16 %v232
    %v643 = vunpack.c.h.b16 %v232
    %v644 = vunpack.c.l.b16 %v233
    %v645 = vunpack.c.h.b16 %v233
    %v646 = vunpack.c.l.b16 %v234
    %v647 = vunpack.c.h.b16 %v234
    %v648 = vunpack.c.l.b16 %v235
    %v649 = vunpack.c.h.b16 %v235
    %v650 = vunpack.c.l.b16 %v236
    %v651 = vunpack.c.h.b16 %v236
    %v652 = vunpack.c.l.b16 %v237
    %v653 = vunpack.c.h.b16 %v237
    %v654 = vunpack.c.l.b16 %v238
    %v655 = vunpack.c.h.b16 %v238
    %v656 = vunpack.c.l.b16 %v239
    %v657 = vunpack.c.h.b16 %v239
    %v658 = vunpack.c.l.b16 %v240
    %v659 = vunpack.c.h.b16 %v240
    %v660 = vunpack.c.l.b16 %v241
    %v661 = vunpack.c.h.b16 %v241
    %v662 = vunpack.c.l.b16 %v242
    %v663 = vunpack.c.h.b16 %v242
    %v664 = vunpack.c.l.b16 %v243
    %v665 = vunpack.c.h.b16 %v243
    %v666 = vunpack.c.l.b16 %v244
    %v667 = vunpack.c.h.b16 %v244
    %v668 = vunpack.c.l.b16 %v245
    %v669 = vunpack.c.h.b16 %v245
    %v670 = vunpack.c.l.b16 %v246
    %v671 = vunpack.c.h.b16 %v246
    %v672 = vunpack.c.l.b16 %v247
    %v673 = vunpack.c.h.b16 %v247
    %v674 = vunpack.c.l.b16 %v248
    %v675 = vunpack.c.h.b16 %v248
    %v676 = vunpack.c.l.b16 %v249
    %v677 = vunpack.c.h.b16 %v249
    %v678 = vunpack.c.l.b16 %v250
    %v679 = vunpack.c.h.b16 %v250
    %v680 = vunpack.c.l.b16 %v251
    %v681 = vunpack.c.h.b16 %v251
    %v682 = vunpack.c.l.b16 %v252
    %v683 = vunpack.c.h.b16 %v252
    %v684 = vunpack.c.l.b16 %v253
    %v685 = vunpack.c.h.b16 %v253
    %v686 = vunpack.c.l.b16 %v254
    %v687 = vunpack.c.h.b16 %v254
    %v688 = vunpack.c.l.b16 %v255
    %v689 = vunpack.c.h.b16 %v255
    %v690 = vunpack.c.l.b16 %v256
    %v691 = vunpack.c.h.b16 %v256
    %v692 = vunpack.c.l.b16 %v257
    %v693 = vunpack.c.h.b16 %v257
    %v694 = vpack.c.b16 %v440, %v438
    %v695 = vpack.c.b16 %v441, %v439
    %v696 = vpack.c.b16 %v444, %v442
    %v697 = vpack.c.b16 %v445, %v443
    %v698 = vpack.c.b16 %v448, %v446
    %v699 = vpack.c.b16 %v449, %v447
    %v700 = vpack.c.b16 %v452, %v450
    %v701 = vpack.c.b16 %v453, %v451
    %v702 = vpack.c.b16 %v456, %v454
    %v703 = vpack.c.b16 %v457, %v455
    %v704 = vpack.c.b16 %v460, %v458
    %v705 = vpack.c.b16 %v461, %v459
    %v706 = vpack.c.b16 %v464, %v462
    %v707 = vpack.c.b16 %v465, %v463
    %v708 = vpack.c.b16 %v468, %v466
    %v709 = vpack.c.b16 %v469, %v467
    %v710 = vpack.c.b16 %v472, %v470
    %v711 = vpack.c.b16 %v473, %v471
    %v712 = vpack.c.b16 %v476, %v474
    %v713 = vpack.c.b16 %v477, %v475
    %v714 = vpack.c.b16 %v480, %v478
    %v715 = vpack.c.b16 %v481, %v479
    %v716 = vpack.c.b16 %v484, %v482
    %v717 = vpack.c.b16 %v485, %v483
    %v718 = vpack.c.b16 %v488, %v486
    %v719 = vpack.c.b16 %v489, %v487
    %v720 = vpack.c.b16 %v492, %v490
    %v721 = vpack.c.b16 %v493, %v491
    %v722 = vpack.c.b16 %v496, %v494
    %v723 = vpack.c.b16 %v497, %v495
    %v724 = vpack.c.b16 %v500, %v498
    %v725 = vpack.c.b16 %v501, %v499
    %v726 = vpack.c.b16 %v504, %v502
    %v727 = vpack.c.b16 %v505, %v503
    %v728 = vpack.c.b16 %v508, %v506
    %v729 = vpack.c.b16 %v509, %v507
    %v730 = vpack.c.b16 %v512, %v510
    %v731 = vpack.c.b16 %v513, %v511
    %v732 = vpack.c.b16 %v516, %v514
    %v733 = vpack.c.b16 %v517, %v515
    %v734 = vpack.c.b16 %v520, %v518
    %v735 = vpack.c.b16 %v521, %v519
    %v736 = vpack.c.b16 %v524, %v522
    %v737 = vpack.c.b16 %v525, %v523
    %v738 = vpack.c.b16 %v528, %v526
    %v739 = vpack.c.b16 %v529, %v527
    %v740 = vpack.c.b16 %v532, %v530
    %v741 = vpack.c.b16 %v533, %v531
    %v742 = vpack.c.b16 %v536, %v534
    %v743 = vpack.c.b16 %v537, %v535
    %v744 = vpack.c.b16 %v540, %v538
    %v745 = vpack.c.b16 %v541, %v539
    %v746 = vpack.c.b16 %v544, %v542
    %v747 = vpack.c.b16 %v545, %v543
    %v748 = vpack.c.b16 %v548, %v546
    %v749 = vpack.c.b16 %v549, %v547
    %v750 = vpack.c.b16 %v552, %v550
    %v751 = vpack.c.b16 %v553, %v551
    %v752 = vpack.c.b16 %v556, %v554
    %v753 = vpack.c.b16 %v557, %v555
    %v754 = vpack.c.b16 %v560, %v558
    %v755 = vpack.c.b16 %v561, %v559
    %v756 = vpack.c.b16 %v564, %v562
    %v757 = vpack.c.b16 %v565, %v563
    %v758 = vpack.c.b16 %v568, %v566
    %v759 = vpack.c.b16 %v569, %v567
    %v760 = vpack.c.b16 %v572, %v570
    %v761 = vpack.c.b16 %v573, %v571
    %v762 = vpack.c.b16 %v576, %v574
    %v763 = vpack.c.b16 %v577, %v575
    %v764 = vpack.c.b16 %v580, %v578
    %v765 = vpack.c.b16 %v581, %v579
    %v766 = vpack.c.b16 %v584, %v582
    %v767 = vpack.c.b16 %v585, %v583
    %v768 = vpack.c.b16 %v588, %v586
    %v769 = vpack.c.b16 %v589, %v587
    %v770 = vpack.c.b16 %v592, %v590
    %v771 = vpack.c.b16 %v593, %v591
    %v772 = vpack.c.b16 %v596, %v594
    %v773 = vpack.c.b16 %v597, %v595
    %v774 = vpack.c.b16 %v600, %v598
    %v775 = vpack.c.b16 %v601, %v599
    %v776 = vpack.c.b16 %v604, %v602
    %v777 = vpack.c.b16 %v605, %v603
    %v778 = vpack.c.b16 %v608, %v606
    %v779 = vpack.c.b16 %v609, %v607
    %v780 = vpack.c.b16 %v612, %v610
    %v781 = vpack.c.b16 %v613, %v611
    %v782 = vpack.c.b16 %v616, %v614
    %v783 = vpack.c.b16 %v617, %v615
    %v784 = vpack.c.b16 %v620, %v618
    %v785 = vpack.c.b16 %v621, %v619
    %v786 = vpack.c.b16 %v624, %v622
    %v787 = vpack.c.b16 %v625, %v623
    %v788 = vpack.c.b16 %v628, %v626
    %v789 = vpack.c.b16 %v629, %v627
    %v790 = vpack.c.b16 %v632, %v630
    %v791 = vpack.c.b16 %v633, %v631
    %v792 = vpack.c.b16 %v636, %v634
    %v793 = vpack.c.b16 %v637, %v635
    %v794 = vpack.c.b16 %v640, %v638
    %v795 = vpack.c.b16 %v641, %v639
    %v796 = vpack.c.b16 %v644, %v642
    %v797 = vpack.c.b16 %v645, %v643
    %v798 = vpack.c.b16 %v648, %v646
    %v799 = vpack.c.b16 %v649, %v647
    %v800 = vpack.c.b16 %v652, %v650
    %v801 = vpack.c.b16 %v653, %v651
    %v802 = vpack.c.b16 %v656, %v654
    %v803 = vpack.c.b16 %v657, %v655
    %v804 = vpack.c.b16 %v660, %v658
    %v805 = vpack.c.b16 %v661, %v659
    %v806 = vpack.c.b16 %v664, %v662
    %v807 = vpack.c.b16 %v665, %v663
    %v808 = vpack.c.b16 %v668, %v666
    %v809 = vpack.c.b16 %v669, %v667
    %v810 = vpack.c.b16 %v672, %v670
    %v811 = vpack.c.b16 %v673, %v671
    %v812 = vpack.c.b16 %v676, %v674
    %v813 = vpack.c.b16 %v677, %v675
    %v814 = vpack.c.b16 %v680, %v678
    %v815 = vpack.c.b16 %v681, %v679
    %v816 = vpack.c.b16 %v684, %v682
    %v817 = vpack.c.b16 %v685, %v683
    %v818 = vpack.c.b16 %v688, %v686
    %v819 = vpack.c.b16 %v689, %v687
    %v820 = vpack.c.b16 %v692, %v690
    %v821 = vpack.c.b16 %v693, %v691
    %950 = vmatprep.subr.bf16.mxu0 %v709
    %951 = vmatpush1.bf16.msra.mxu0 %v708
    %952 = vmatprep.subr.bf16.mxu0 %v707
    %953 = vmatpush1.bf16.msra.mxu0 %v706
    %954 = vmatprep.subr.bf16.mxu0 %v705
    %955 = vmatpush1.bf16.msra.mxu0 %v704
    %956 = vmatprep.subr.bf16.mxu0 %v703
    %957 = vmatpush1.bf16.msra.mxu0 %v702
    %958 = vmatprep.subr.bf16.mxu0 %v701
    %959 = vmatpush1.bf16.msra.mxu0 %v700
    %960 = vmatprep.subr.bf16.mxu0 %v699
    %961 = vmatpush1.bf16.msra.mxu0 %v698
    %962 = vmatprep.subr.bf16.mxu0 %v697
    %963 = vmatpush1.bf16.msra.mxu0 %v696
    %964 = vmatprep.subr.bf16.mxu0 %v695
    %965 = vmatpush1.bf16.msra.mxu0 %v694
    %966 = vmatprep.subr.bf16.mxu0 %v725
    %967 = vmatpush2.bf16.msra.mxu0 %v724
    %968 = vmatprep.subr.bf16.mxu0 %v723
    %969 = vmatpush2.bf16.msra.mxu0 %v722
    %970 = vmatprep.subr.bf16.mxu0 %v721
    %971 = vmatpush2.bf16.msra.mxu0 %v720
    %972 = vmatprep.subr.bf16.mxu0 %v719
    %973 = vmatpush2.bf16.msra.mxu0 %v718
    %974 = vmatprep.subr.bf16.mxu0 %v717
    %975 = vmatpush2.bf16.msra.mxu0 %v716
    %976 = vmatprep.subr.bf16.mxu0 %v715
    %977 = vmatpush2.bf16.msra.mxu0 %v714
    %978 = vmatprep.subr.bf16.mxu0 %v713
    %979 = vmatpush2.bf16.msra.mxu0 %v712
    %980 = vmatprep.subr.bf16.mxu0 %v711
    %981 = vmatpush2.bf16.msra.mxu0 %v710
    %982 = vmatprep.mubr.bf16.mxu0 %v295
    %983 = vmatmul.mubr.bf16.gmra.mxu0 %v294
    %v984 = vpop.f32.mrf.mxu0
    %v985 = vadd.f32 %v263, %v984
    %v986 = vpop.f32.mrf.mxu0
    %v987 = vadd.f32 %v267, %v986
    %v988 = vpop.f32.mrf.mxu0
    %v989 = vadd.f32 %v263, %v988
    %v990 = vpop.f32.mrf.mxu0
    %v991 = vadd.f32 %v267, %v990
    %992 = vdwg.mxu0
    %993 = vmatprep.subr.bf16.mxu0 %v741
    %994 = vmatpush1.bf16.msra.mxu0 %v740
    %995 = vmatprep.subr.bf16.mxu0 %v739
    %996 = vmatpush1.bf16.msra.mxu0 %v738
    %997 = vmatprep.subr.bf16.mxu0 %v737
    %998 = vmatpush1.bf16.msra.mxu0 %v736
    %999 = vmatprep.subr.bf16.mxu0 %v735
    %1000 = vmatpush1.bf16.msra.mxu0 %v734
    %1001 = vmatprep.subr.bf16.mxu0 %v733
    %1002 = vmatpush1.bf16.msra.mxu0 %v732
    %1003 = vmatprep.subr.bf16.mxu0 %v731
    %1004 = vmatpush1.bf16.msra.mxu0 %v730
    %1005 = vmatprep.subr.bf16.mxu0 %v729
    %1006 = vmatpush1.bf16.msra.mxu0 %v728
    %1007 = vmatprep.subr.bf16.mxu0 %v727
    %1008 = vmatpush1.bf16.msra.mxu0 %v726
    %1009 = vmatprep.subr.bf16.mxu0 %v757
    %1010 = vmatpush2.bf16.msra.mxu0 %v756
    %1011 = vmatprep.subr.bf16.mxu0 %v755
    %1012 = vmatpush2.bf16.msra.mxu0 %v754
    %1013 = vmatprep.subr.bf16.mxu0 %v753
    %1014 = vmatpush2.bf16.msra.mxu0 %v752
    %1015 = vmatprep.subr.bf16.mxu0 %v751
    %1016 = vmatpush2.bf16.msra.mxu0 %v750
    %1017 = vmatprep.subr.bf16.mxu0 %v749
    %1018 = vmatpush2.bf16.msra.mxu0 %v748
    %1019 = vmatprep.subr.bf16.mxu0 %v747
    %1020 = vmatpush2.bf16.msra.mxu0 %v746
    %1021 = vmatprep.subr.bf16.mxu0 %v745
    %1022 = vmatpush2.bf16.msra.mxu0 %v744
    %1023 = vmatprep.subr.bf16.mxu0 %v743
    %1024 = vmatpush2.bf16.msra.mxu0 %v742
    %1025 = vmatprep.mubr.bf16.mxu0 %v297
    %1026 = vmatmul.mubr.bf16.gmra.mxu0 %v296
    %v1027 = vpop.f32.mrf.mxu0
    %v1028 = vadd.f32 %v985, %v1027
    %v1029 = vpop.f32.mrf.mxu0
    %v1030 = vadd.f32 %v987, %v1029
    %v1031 = vpop.f32.mrf.mxu0
    %v1032 = vadd.f32 %v989, %v1031
    %v1033 = vpop.f32.mrf.mxu0
    %v1034 = vadd.f32 %v991, %v1033
    %1035 = vdwg.mxu0
    %1036 = vmatprep.subr.bf16.mxu0 %v773
    %1037 = vmatpush1.bf16.msra.mxu0 %v772
    %1038 = vmatprep.subr.bf16.mxu0 %v771
    %1039 = vmatpush1.bf16.msra.mxu0 %v770
    %1040 = vmatprep.subr.bf16.mxu0 %v769
    %1041 = vmatpush1.bf16.msra.mxu0 %v768
    %1042 = vmatprep.subr.bf16.mxu0 %v767
    %1043 = vmatpush1.bf16.msra.mxu0 %v766
    %1044 = vmatprep.subr.bf16.mxu0 %v765
    %1045 = vmatpush1.bf16.msra.mxu0 %v764
    %1046 = vmatprep.subr.bf16.mxu0 %v763
    %1047 = vmatpush1.bf16.msra.mxu0 %v762
    %1048 = vmatprep.subr.bf16.mxu0 %v761
    %1049 = vmatpush1.bf16.msra.mxu0 %v760
    %1050 = vmatprep.subr.bf16.mxu0 %v759
    %1051 = vmatpush1.bf16.msra.mxu0 %v758
    %1052 = vmatprep.subr.bf16.mxu0 %v789
    %1053 = vmatpush2.bf16.msra.mxu0 %v788
    %1054 = vmatprep.subr.bf16.mxu0 %v787
    %1055 = vmatpush2.bf16.msra.mxu0 %v786
    %1056 = vmatprep.subr.bf16.mxu0 %v785
    %1057 = vmatpush2.bf16.msra.mxu0 %v784
    %1058 = vmatprep.subr.bf16.mxu0 %v783
    %1059 = vmatpush2.bf16.msra.mxu0 %v782
    %1060 = vmatprep.subr.bf16.mxu0 %v781
    %1061 = vmatpush2.bf16.msra.mxu0 %v780
    %1062 = vmatprep.subr.bf16.mxu0 %v779
    %1063 = vmatpush2.bf16.msra.mxu0 %v778
    %1064 = vmatprep.subr.bf16.mxu0 %v777
    %1065 = vmatpush2.bf16.msra.mxu0 %v776
    %1066 = vmatprep.subr.bf16.mxu0 %v775
    %1067 = vmatpush2.bf16.msra.mxu0 %v774
    %1068 = vmatprep.mubr.bf16.mxu0 %v299
    %1069 = vmatmul.mubr.bf16.gmra.mxu0 %v298
    %v1070 = vpop.f32.mrf.mxu0
    %v1071 = vadd.f32 %v1028, %v1070
    %v1072 = vpop.f32.mrf.mxu0
    %v1073 = vadd.f32 %v1030, %v1072
    %v1074 = vpop.f32.mrf.mxu0
    %v1075 = vadd.f32 %v1032, %v1074
    %v1076 = vpop.f32.mrf.mxu0
    %v1077 = vadd.f32 %v1034, %v1076
    %1078 = vdwg.mxu0
    %1079 = vmatprep.subr.bf16.mxu0 %v805
    %1080 = vmatpush1.bf16.msra.mxu0 %v804
    %1081 = vmatprep.subr.bf16.mxu0 %v803
    %1082 = vmatpush1.bf16.msra.mxu0 %v802
    %1083 = vmatprep.subr.bf16.mxu0 %v801
    %1084 = vmatpush1.bf16.msra.mxu0 %v800
    %1085 = vmatprep.subr.bf16.mxu0 %v799
    %1086 = vmatpush1.bf16.msra.mxu0 %v798
    %1087 = vmatprep.subr.bf16.mxu0 %v797
    %1088 = vmatpush1.bf16.msra.mxu0 %v796
    %1089 = vmatprep.subr.bf16.mxu0 %v795
    %1090 = vmatpush1.bf16.msra.mxu0 %v794
    %1091 = vmatprep.subr.bf16.mxu0 %v793
    %1092 = vmatpush1.bf16.msra.mxu0 %v792
    %1093 = vmatprep.subr.bf16.mxu0 %v791
    %1094 = vmatpush1.bf16.msra.mxu0 %v790
    %1095 = vmatprep.subr.bf16.mxu0 %v821
    %1096 = vmatpush2.bf16.msra.mxu0 %v820
    %1097 = vmatprep.subr.bf16.mxu0 %v819
    %1098 = vmatpush2.bf16.msra.mxu0 %v818
    %1099 = vmatprep.subr.bf16.mxu0 %v817
    %1100 = vmatpush2.bf16.msra.mxu0 %v816
    %1101 = vmatprep.subr.bf16.mxu0 %v815
    %1102 = vmatpush2.bf16.msra.mxu0 %v814
    %1103 = vmatprep.subr.bf16.mxu0 %v813
    %1104 = vmatpush2.bf16.msra.mxu0 %v812
    %1105 = vmatprep.subr.bf16.mxu0 %v811
    %1106 = vmatpush2.bf16.msra.mxu0 %v810
    %1107 = vmatprep.subr.bf16.mxu0 %v809
    %1108 = vmatpush2.bf16.msra.mxu0 %v808
    %1109 = vmatprep.subr.bf16.mxu0 %v807
    %1110 = vmatpush2.bf16.msra.mxu0 %v806
    %1111 = vmatprep.mubr.bf16.mxu0 %v301
    %1112 = vmatmul.mubr.bf16.gmra.mxu0 %v300
    %v1113 = vpop.f32.mrf.mxu0
    %v1114 = vadd.f32 %v1071, %v1113
    %v1115 = vpop.f32.mrf.mxu0
    %v1116 = vadd.f32 %v1073, %v1115
    %v1117 = vpop.f32.mrf.mxu0
    %v1118 = vadd.f32 %v1075, %v1117
    %v1119 = vpop.f32.mrf.mxu0
    %v1120 = vadd.f32 %v1077, %v1119
    %1121 = vdwg.mxu0
    %v1122 = vmax.f32 %v1114, 0.0
    %v1123 = vmax.f32 %v1116, 0.0
    %v1124 = vmax.f32 %v1118, 0.0
    %v1125 = vmax.f32 %v1120, 0.0
    %v1126 = vpack.c.bf16 %v1124, %v1122
    %v1127 = vpack.c.bf16 %v1125, %v1123
    %v1128 = vld [vmem:[#allocation8] sm:$0xff]
    %v1129 = vld [vmem:[#allocation8 + $0x8] sm:$0xff]
    %v1130 = vld [vmem:[#allocation8 + $0x10] sm:$0xff]
    %v1131 = vld [vmem:[#allocation8 + $0x18] sm:$0xff]
    %v1132 = vld [vmem:[#allocation8 + $0x20] sm:$0xff]
    %v1133 = vld [vmem:[#allocation8 + $0x28] sm:$0xff]
    %v1134 = vld [vmem:[#allocation8 + $0x30] sm:$0xff]
    %v1135 = vld [vmem:[#allocation8 + $0x38] sm:$0xff]
    %v1136 = vld [vmem:[#allocation8 + $0x40] sm:$0xff]
    %v1137 = vld [vmem:[#allocation8 + $0x48] sm:$0xff]
    %v1138 = vld [vmem:[#allocation8 + $0x50] sm:$0xff]
    %v1139 = vld [vmem:[#allocation8 + $0x58] sm:$0xff]
    %v1140 = vld [vmem:[#allocation8 + $0x60] sm:$0xff]
    %v1141 = vld [vmem:[#allocation8 + $0x68] sm:$0xff]
    %v1142 = vld [vmem:[#allocation8 + $0x70] sm:$0xff]
    %v1143 = vld [vmem:[#allocation8 + $0x78] sm:$0xff]
    %v1144 = vld [vmem:[#allocation8 + $0x80] sm:$0xff]
    %v1145 = vld [vmem:[#allocation8 + $0x88] sm:$0xff]
    %v1146 = vld [vmem:[#allocation8 + $0x90] sm:$0xff]
    %v1147 = vld [vmem:[#allocation8 + $0x98] sm:$0xff]
    %v1148 = vld [vmem:[#allocation8 + $0xa0] sm:$0xff]
    %v1149 = vld [vmem:[#allocation8 + $0xa8] sm:$0xff]
    %v1150 = vld [vmem:[#allocation8 + $0xb0] sm:$0xff]
    %v1151 = vld [vmem:[#allocation8 + $0xb8] sm:$0xff]
    %v1152 = vld [vmem:[#allocation8 + $0xc0] sm:$0xff]
    %v1153 = vld [vmem:[#allocation8 + $0xc8] sm:$0xff]
    %v1154 = vld [vmem:[#allocation8 + $0xd0] sm:$0xff]
    %v1155 = vld [vmem:[#allocation8 + $0xd8] sm:$0xff]
    %v1156 = vld [vmem:[#allocation8 + $0xe0] sm:$0xff]
    %v1157 = vld [vmem:[#allocation8 + $0xe8] sm:$0xff]
    %v1158 = vld [vmem:[#allocation8 + $0xf0] sm:$0xff]
    %v1159 = vld [vmem:[#allocation8 + $0xf8] sm:$0xff]
    %v1160 = vld [vmem:[%s5] sm:$0x3]
    %v1162 = vlaneseq
    %v1163 = vshrl.u32 %v1162, 7
    %v1164 = vsub.s32 0, %v1163
    %v1165 = vrot.slane %v1160, %v1164
    %v1166 = vlaneseq
    %v1167 = vshrl.u32 %v1166, 7
    %v1168 = vsub.s32 1, %v1167
    %v1169 = vrot.slane %v1160, %v1168
    %v1204 = vunpack.c.l.b16 %v1128
    %v1205 = vunpack.c.h.b16 %v1128
    %v1206 = vunpack.c.l.b16 %v1129
    %v1207 = vunpack.c.h.b16 %v1129
    %v1208 = vunpack.c.l.b16 %v1130
    %v1209 = vunpack.c.h.b16 %v1130
    %v1210 = vunpack.c.l.b16 %v1131
    %v1211 = vunpack.c.h.b16 %v1131
    %v1212 = vunpack.c.l.b16 %v1132
    %v1213 = vunpack.c.h.b16 %v1132
    %v1214 = vunpack.c.l.b16 %v1133
    %v1215 = vunpack.c.h.b16 %v1133
    %v1216 = vunpack.c.l.b16 %v1134
    %v1217 = vunpack.c.h.b16 %v1134
    %v1218 = vunpack.c.l.b16 %v1135
    %v1219 = vunpack.c.h.b16 %v1135
    %v1220 = vunpack.c.l.b16 %v1136
    %v1221 = vunpack.c.h.b16 %v1136
    %v1222 = vunpack.c.l.b16 %v1137
    %v1223 = vunpack.c.h.b16 %v1137
    %v1224 = vunpack.c.l.b16 %v1138
    %v1225 = vunpack.c.h.b16 %v1138
    %v1226 = vunpack.c.l.b16 %v1139
    %v1227 = vunpack.c.h.b16 %v1139
    %v1228 = vunpack.c.l.b16 %v1140
    %v1229 = vunpack.c.h.b16 %v1140
    %v1230 = vunpack.c.l.b16 %v1141
    %v1231 = vunpack.c.h.b16 %v1141
    %v1232 = vunpack.c.l.b16 %v1142
    %v1233 = vunpack.c.h.b16 %v1142
    %v1234 = vunpack.c.l.b16 %v1143
    %v1235 = vunpack.c.h.b16 %v1143
    %v1236 = vunpack.c.l.b16 %v1144
    %v1237 = vunpack.c.h.b16 %v1144
    %v1238 = vunpack.c.l.b16 %v1145
    %v1239 = vunpack.c.h.b16 %v1145
    %v1240 = vunpack.c.l.b16 %v1146
    %v1241 = vunpack.c.h.b16 %v1146
    %v1242 = vunpack.c.l.b16 %v1147
    %v1243 = vunpack.c.h.b16 %v1147
    %v1244 = vunpack.c.l.b16 %v1148
    %v1245 = vunpack.c.h.b16 %v1148
    %v1246 = vunpack.c.l.b16 %v1149
    %v1247 = vunpack.c.h.b16 %v1149
    %v1248 = vunpack.c.l.b16 %v1150
    %v1249 = vunpack.c.h.b16 %v1150
    %v1250 = vunpack.c.l.b16 %v1151
    %v1251 = vunpack.c.h.b16 %v1151
    %v1252 = vunpack.c.l.b16 %v1152
    %v1253 = vunpack.c.h.b16 %v1152
    %v1254 = vunpack.c.l.b16 %v1153
    %v1255 = vunpack.c.h.b16 %v1153
    %v1256 = vunpack.c.l.b16 %v1154
    %v1257 = vunpack.c.h.b16 %v1154
    %v1258 = vunpack.c.l.b16 %v1155
    %v1259 = vunpack.c.h.b16 %v1155
    %v1260 = vunpack.c.l.b16 %v1156
    %v1261 = vunpack.c.h.b16 %v1156
    %v1262 = vunpack.c.l.b16 %v1157
    %v1263 = vunpack.c.h.b16 %v1157
    %v1264 = vunpack.c.l.b16 %v1158
    %v1265 = vunpack.c.h.b16 %v1158
    %v1266 = vunpack.c.l.b16 %v1159
    %v1267 = vunpack.c.h.b16 %v1159
    %v1268 = vpack.c.b16 %v1206, %v1204
    %v1269 = vpack.c.b16 %v1207, %v1205
    %v1270 = vpack.c.b16 %v1210, %v1208
    %v1271 = vpack.c.b16 %v1211, %v1209
    %v1272 = vpack.c.b16 %v1214, %v1212
    %v1273 = vpack.c.b16 %v1215, %v1213
    %v1274 = vpack.c.b16 %v1218, %v1216
    %v1275 = vpack.c.b16 %v1219, %v1217
    %v1276 = vpack.c.b16 %v1222, %v1220
    %v1277 = vpack.c.b16 %v1223, %v1221
    %v1278 = vpack.c.b16 %v1226, %v1224
    %v1279 = vpack.c.b16 %v1227, %v1225
    %v1280 = vpack.c.b16 %v1230, %v1228
    %v1281 = vpack.c.b16 %v1231, %v1229
    %v1282 = vpack.c.b16 %v1234, %v1232
    %v1283 = vpack.c.b16 %v1235, %v1233
    %v1284 = vpack.c.b16 %v1238, %v1236
    %v1285 = vpack.c.b16 %v1239, %v1237
    %v1286 = vpack.c.b16 %v1242, %v1240
    %v1287 = vpack.c.b16 %v1243, %v1241
    %v1288 = vpack.c.b16 %v1246, %v1244
    %v1289 = vpack.c.b16 %v1247, %v1245
    %v1290 = vpack.c.b16 %v1250, %v1248
    %v1291 = vpack.c.b16 %v1251, %v1249
    %v1292 = vpack.c.b16 %v1254, %v1252
    %v1293 = vpack.c.b16 %v1255, %v1253
    %v1294 = vpack.c.b16 %v1258, %v1256
    %v1295 = vpack.c.b16 %v1259, %v1257
    %v1296 = vpack.c.b16 %v1262, %v1260
    %v1297 = vpack.c.b16 %v1263, %v1261
    %v1298 = vpack.c.b16 %v1266, %v1264
    %v1299 = vpack.c.b16 %v1267, %v1265
    %1332 = vmatprep.subr.bf16.mxu0 %v1283
    %1333 = vmatpush1.bf16.msra.mxu0 %v1282
    %1334 = vmatprep.subr.bf16.mxu0 %v1281
    %1335 = vmatpush1.bf16.msra.mxu0 %v1280
    %1336 = vmatprep.subr.bf16.mxu0 %v1279
    %1337 = vmatpush1.bf16.msra.mxu0 %v1278
    %1338 = vmatprep.subr.bf16.mxu0 %v1277
    %1339 = vmatpush1.bf16.msra.mxu0 %v1276
    %1340 = vmatprep.subr.bf16.mxu0 %v1275
    %1341 = vmatpush1.bf16.msra.mxu0 %v1274
    %1342 = vmatprep.subr.bf16.mxu0 %v1273
    %1343 = vmatpush1.bf16.msra.mxu0 %v1272
    %1344 = vmatprep.subr.bf16.mxu0 %v1271
    %1345 = vmatpush1.bf16.msra.mxu0 %v1270
    %1346 = vmatprep.subr.bf16.mxu0 %v1269
    %1347 = vmatpush1.bf16.msra.mxu0 %v1268
    %1348 = vmatprep.subr.bf16.mxu0 %v1299
    %1349 = vmatpush2.bf16.msra.mxu0 %v1298
    %1350 = vmatprep.subr.bf16.mxu0 %v1297
    %1351 = vmatpush2.bf16.msra.mxu0 %v1296
    %1352 = vmatprep.subr.bf16.mxu0 %v1295
    %1353 = vmatpush2.bf16.msra.mxu0 %v1294
    %1354 = vmatprep.subr.bf16.mxu0 %v1293
    %1355 = vmatpush2.bf16.msra.mxu0 %v1292
    %1356 = vmatprep.subr.bf16.mxu0 %v1291
    %1357 = vmatpush2.bf16.msra.mxu0 %v1290
    %1358 = vmatprep.subr.bf16.mxu0 %v1289
    %1359 = vmatpush2.bf16.msra.mxu0 %v1288
    %1360 = vmatprep.subr.bf16.mxu0 %v1287
    %1361 = vmatpush2.bf16.msra.mxu0 %v1286
    %1362 = vmatprep.subr.bf16.mxu0 %v1285
    %1363 = vmatpush2.bf16.msra.mxu0 %v1284
    %1364 = vmatprep.mubr.bf16.mxu0 %v1127
    %1365 = vmatmul.mubr.bf16.gmra.mxu0 %v1126
    %v1366 = vpop.f32.mrf.mxu0
    %v1367 = vadd.f32 %v1165, %v1366
    %v1368 = vpop.f32.mrf.mxu0
    %v1369 = vadd.f32 %v1169, %v1368
    %v1370 = vpop.f32.mrf.mxu0
    %v1371 = vadd.f32 %v1165, %v1370
    %v1372 = vpop.f32.mrf.mxu0
    %v1373 = vadd.f32 %v1169, %v1372
    %1374 = vdwg.mxu0
    %v1375 = vmul.f32 %v1369, 0.5
    %v1376 = vmul.f32 %v1373, 0.5
    %v1377 = vmul.f32 %v1375, 1.442695
    %v1378 = vpow.pop %v1377
    %v1379 = vmul.f32 %v1376, 1.442695
    %v1380 = vpow.pop %v1379
    %v1381 = vld [vmem:[#allocation5] sm:$0xff]
    %v1382 = vld [vmem:[#allocation5 + $0x8] sm:$0xff]
    %v1383 = vmul.f32 %v1378, %v1381
    %v1384 = vmul.f32 %v1380, %v1382
    %v1385 = vadd.f32 %v1367, %v1383
    %v1386 = vadd.f32 %v1371, %v1384
    %1387 = vst [vmem:[#allocation13] sm:$0xff] %v1367
    %1388 = vst [vmem:[#allocation13 + $0x18] sm:$0xff] %v1371
    %1389 = vst [vmem:[#allocation13 + $0x8] sm:$0xff] %v1369
    %1390 = vst [vmem:[#allocation13 + $0x20] sm:$0xff] %v1373
    %1391 = vst [vmem:[#allocation13 + $0x10] sm:$0xff] %v1385
    %1392 = vst [vmem:[#allocation13 + $0x28] sm:$0xff] %v1386
    %v1393 = vpack.c.bf16 %v1386, %v1385
    %v1394 = vld [vmem:[#allocation10] sm:$0xff]
    %v1395 = vld [vmem:[#allocation10 + $0x8] sm:$0xff]
    %v1396 = vld [vmem:[#allocation10 + $0x10] sm:$0xff]
    %v1397 = vld [vmem:[#allocation10 + $0x18] sm:$0xff]
    %v1398 = vld [vmem:[#allocation10 + $0x20] sm:$0xff]
    %v1399 = vld [vmem:[#allocation10 + $0x28] sm:$0xff]
    %v1400 = vld [vmem:[#allocation10 + $0x30] sm:$0xff]
    %v1401 = vld [vmem:[#allocation10 + $0x38] sm:$0xff]
    %v1402 = vld [vmem:[#allocation10 + $0x40] sm:$0xff]
    %v1403 = vld [vmem:[#allocation10 + $0x48] sm:$0xff]
    %v1404 = vld [vmem:[#allocation10 + $0x50] sm:$0xff]
    %v1405 = vld [vmem:[#allocation10 + $0x58] sm:$0xff]
    %v1406 = vld [vmem:[#allocation10 + $0x60] sm:$0xff]
    %v1407 = vld [vmem:[#allocation10 + $0x68] sm:$0xff]
    %v1408 = vld [vmem:[#allocation10 + $0x70] sm:$0xff]
    %v1409 = vld [vmem:[#allocation10 + $0x78] sm:$0xff]
    %v1410 = vld [vmem:[%s7] sm:$0x3]
    %v1412 = vlaneseq
    %v1413 = vshrl.u32 %v1412, 7
    %v1414 = vsub.s32 0, %v1413
    %v1415 = vrot.slane %v1410, %v1414
    %v1416 = vlaneseq
    %v1417 = vshrl.u32 %v1416, 7
    %v1418 = vsub.s32 1, %v1417
    %v1419 = vrot.slane %v1410, %v1418
    %v1438 = vunpack.c.l.b16 %v1394
    %v1439 = vunpack.c.h.b16 %v1394
    %v1440 = vunpack.c.l.b16 %v1395
    %v1441 = vunpack.c.h.b16 %v1395
    %v1442 = vunpack.c.l.b16 %v1396
    %v1443 = vunpack.c.h.b16 %v1396
    %v1444 = vunpack.c.l.b16 %v1397
    %v1445 = vunpack.c.h.b16 %v1397
    %v1446 = vunpack.c.l.b16 %v1398
    %v1447 = vunpack.c.h.b16 %v1398
    %v1448 = vunpack.c.l.b16 %v1399
    %v1449 = vunpack.c.h.b16 %v1399
    %v1450 = vunpack.c.l.b16 %v1400
    %v1451 = vunpack.c.h.b16 %v1400
    %v1452 = vunpack.c.l.b16 %v1401
    %v1453 = vunpack.c.h.b16 %v1401
    %v1454 = vunpack.c.l.b16 %v1402
    %v1455 = vunpack.c.h.b16 %v1402
    %v1456 = vunpack.c.l.b16 %v1403
    %v1457 = vunpack.c.h.b16 %v1403
    %v1458 = vunpack.c.l.b16 %v1404
    %v1459 = vunpack.c.h.b16 %v1404
    %v1460 = vunpack.c.l.b16 %v1405
    %v1461 = vunpack.c.h.b16 %v1405
    %v1462 = vunpack.c.l.b16 %v1406
    %v1463 = vunpack.c.h.b16 %v1406
    %v1464 = vunpack.c.l.b16 %v1407
    %v1465 = vunpack.c.h.b16 %v1407
    %v1466 = vunpack.c.l.b16 %v1408
    %v1467 = vunpack.c.h.b16 %v1408
    %v1468 = vunpack.c.l.b16 %v1409
    %v1469 = vunpack.c.h.b16 %v1409
    %v1470 = vpack.c.b16 %v1440, %v1438
    %v1471 = vpack.c.b16 %v1441, %v1439
    %v1472 = vpack.c.b16 %v1444, %v1442
    %v1473 = vpack.c.b16 %v1445, %v1443
    %v1474 = vpack.c.b16 %v1448, %v1446
    %v1475 = vpack.c.b16 %v1449, %v1447
    %v1476 = vpack.c.b16 %v1452, %v1450
    %v1477 = vpack.c.b16 %v1453, %v1451
    %v1478 = vpack.c.b16 %v1456, %v1454
    %v1479 = vpack.c.b16 %v1457, %v1455
    %v1480 = vpack.c.b16 %v1460, %v1458
    %v1481 = vpack.c.b16 %v1461, %v1459
    %v1482 = vpack.c.b16 %v1464, %v1462
    %v1483 = vpack.c.b16 %v1465, %v1463
    %v1484 = vpack.c.b16 %v1468, %v1466
    %v1485 = vpack.c.b16 %v1469, %v1467
    %1502 = vmatprep.subr.bf16.mxu0 %v1485
    %1503 = vmatpush1.bf16.msra.mxu0 %v1484
    %1504 = vmatprep.subr.bf16.mxu0 %v1483
    %1505 = vmatpush1.bf16.msra.mxu0 %v1482
    %1506 = vmatprep.subr.bf16.mxu0 %v1481
    %1507 = vmatpush1.bf16.msra.mxu0 %v1480
    %1508 = vmatprep.subr.bf16.mxu0 %v1479
    %1509 = vmatpush1.bf16.msra.mxu0 %v1478
    %1510 = vmatprep.subr.bf16.mxu0 %v1477
    %1511 = vmatpush1.bf16.msra.mxu0 %v1476
    %1512 = vmatprep.subr.bf16.mxu0 %v1475
    %1513 = vmatpush1.bf16.msra.mxu0 %v1474
    %1514 = vmatprep.subr.bf16.mxu0 %v1473
    %1515 = vmatpush1.bf16.msra.mxu0 %v1472
    %1516 = vmatprep.subr.bf16.mxu0 %v1471
    %1517 = vmatpush1.bf16.msra.mxu0 %v1470
    %1518 = vmatprep.subr.bf16.mxu0 0
    %1519 = vmatpush2.bf16.msra.mxu0 0
    %1520 = vmatprep.subr.bf16.mxu0 0
    %1521 = vmatpush2.bf16.msra.mxu0 0
    %1522 = vmatprep.subr.bf16.mxu0 0
    %1523 = vmatpush2.bf16.msra.mxu0 0
    %1524 = vmatprep.subr.bf16.mxu0 0
    %1525 = vmatpush2.bf16.msra.mxu0 0
    %1526 = vmatprep.subr.bf16.mxu0 0
    %1527 = vmatpush2.bf16.msra.mxu0 0
    %1528 = vmatprep.subr.bf16.mxu0 0
    %1529 = vmatpush2.bf16.msra.mxu0 0
    %1530 = vmatprep.subr.bf16.mxu0 0
    %1531 = vmatpush2.bf16.msra.mxu0 0
    %1532 = vmatprep.subr.bf16.mxu0 0
    %1533 = vmatpush2.bf16.msra.mxu0 0
    %1534 = vmatprep.mubr.bf16.mxu0 0
    %1535 = vmatmul.mubr.bf16.gmra.mxu0 %v1393
    %v1536 = vpop.f32.mrf.mxu0
    %v1537 = vadd.f32 %v1415, %v1536
    %v1538 = vpop.f32.mrf.mxu0
    %v1539 = vadd.f32 %v1419, %v1538
    %v1540 = vpop.f32.mrf.mxu0
    %v1541 = vadd.f32 %v1415, %v1540
    %v1542 = vpop.f32.mrf.mxu0
    %v1543 = vadd.f32 %v1419, %v1542
    %1544 = vdwg.mxu0
    %v1545 = vmax.f32 %v1537, 0.0
    %v1546 = vmax.f32 %v1539, 0.0
    %v1547 = vmax.f32 %v1541, 0.0
    %v1548 = vmax.f32 %v1543, 0.0
    %v1549 = vpack.c.bf16 %v1547, %v1545
    %v1550 = vpack.c.bf16 %v1548, %v1546
    %v1551 = vld [vmem:[#allocation11] sm:$0xff]
    %v1552 = vld [vmem:[#allocation11 + $0x8] sm:$0xff]
    %v1553 = vld [vmem:[#allocation11 + $0x10] sm:$0xff]
    %v1554 = vld [vmem:[#allocation11 + $0x18] sm:$0xff]
    %v1555 = vld [vmem:[#allocation11 + $0x20] sm:$0xff]
    %v1556 = vld [vmem:[#allocation11 + $0x28] sm:$0xff]
    %v1557 = vld [vmem:[#allocation11 + $0x30] sm:$0xff]
    %v1558 = vld [vmem:[#allocation11 + $0x38] sm:$0xff]
    %v1559 = vld [vmem:[#allocation11 + $0x40] sm:$0xff]
    %v1560 = vld [vmem:[#allocation11 + $0x48] sm:$0xff]
    %v1561 = vld [vmem:[#allocation11 + $0x50] sm:$0xff]
    %v1562 = vld [vmem:[#allocation11 + $0x58] sm:$0xff]
    %v1563 = vld [vmem:[#allocation11 + $0x60] sm:$0xff]
    %v1564 = vld [vmem:[#allocation11 + $0x68] sm:$0xff]
    %v1565 = vld [vmem:[#allocation11 + $0x70] sm:$0xff]
    %v1566 = vld [vmem:[#allocation11 + $0x78] sm:$0xff]
    %v1567 = vld [vmem:[#allocation11 + $0x80] sm:$0xff]
    %v1568 = vld [vmem:[#allocation11 + $0x88] sm:$0xff]
    %v1569 = vld [vmem:[#allocation11 + $0x90] sm:$0xff]
    %v1570 = vld [vmem:[#allocation11 + $0x98] sm:$0xff]
    %v1571 = vld [vmem:[#allocation11 + $0xa0] sm:$0xff]
    %v1572 = vld [vmem:[#allocation11 + $0xa8] sm:$0xff]
    %v1573 = vld [vmem:[#allocation11 + $0xb0] sm:$0xff]
    %v1574 = vld [vmem:[#allocation11 + $0xb8] sm:$0xff]
    %v1575 = vld [vmem:[#allocation11 + $0xc0] sm:$0xff]
    %v1576 = vld [vmem:[#allocation11 + $0xc8] sm:$0xff]
    %v1577 = vld [vmem:[#allocation11 + $0xd0] sm:$0xff]
    %v1578 = vld [vmem:[#allocation11 + $0xd8] sm:$0xff]
    %v1579 = vld [vmem:[#allocation11 + $0xe0] sm:$0xff]
    %v1580 = vld [vmem:[#allocation11 + $0xe8] sm:$0xff]
    %v1581 = vld [vmem:[#allocation11 + $0xf0] sm:$0xff]
    %v1582 = vld [vmem:[#allocation11 + $0xf8] sm:$0xff]
    %v1583 = vld [vmem:[#allocation11 + $0x100] sm:$0xff]
    %v1584 = vld [vmem:[#allocation11 + $0x108] sm:$0xff]
    %v1585 = vld [vmem:[#allocation11 + $0x110] sm:$0xff]
    %v1586 = vld [vmem:[#allocation11 + $0x118] sm:$0xff]
    %v1587 = vld [vmem:[#allocation11 + $0x120] sm:$0xff]
    %v1588 = vld [vmem:[#allocation11 + $0x128] sm:$0xff]
    %v1589 = vld [vmem:[#allocation11 + $0x130] sm:$0xff]
    %v1590 = vld [vmem:[#allocation11 + $0x138] sm:$0xff]
    %v1591 = vld [vmem:[#allocation11 + $0x140] sm:$0xff]
    %v1592 = vld [vmem:[#allocation11 + $0x148] sm:$0xff]
    %v1593 = vld [vmem:[#allocation11 + $0x150] sm:$0xff]
    %v1594 = vld [vmem:[#allocation11 + $0x158] sm:$0xff]
    %v1595 = vld [vmem:[#allocation11 + $0x160] sm:$0xff]
    %v1596 = vld [vmem:[#allocation11 + $0x168] sm:$0xff]
    %v1597 = vld [vmem:[#allocation11 + $0x170] sm:$0xff]
    %v1598 = vld [vmem:[#allocation11 + $0x178] sm:$0xff]
    %v1599 = vld [vmem:[#allocation11 + $0x180] sm:$0xff]
    %v1600 = vld [vmem:[#allocation11 + $0x188] sm:$0xff]
    %v1601 = vld [vmem:[#allocation11 + $0x190] sm:$0xff]
    %v1602 = vld [vmem:[#allocation11 + $0x198] sm:$0xff]
    %v1603 = vld [vmem:[#allocation11 + $0x1a0] sm:$0xff]
    %v1604 = vld [vmem:[#allocation11 + $0x1a8] sm:$0xff]
    %v1605 = vld [vmem:[#allocation11 + $0x1b0] sm:$0xff]
    %v1606 = vld [vmem:[#allocation11 + $0x1b8] sm:$0xff]
    %v1607 = vld [vmem:[#allocation11 + $0x1c0] sm:$0xff]
    %v1608 = vld [vmem:[#allocation11 + $0x1c8] sm:$0xff]
    %v1609 = vld [vmem:[#allocation11 + $0x1d0] sm:$0xff]
    %v1610 = vld [vmem:[#allocation11 + $0x1d8] sm:$0xff]
    %v1611 = vld [vmem:[#allocation11 + $0x1e0] sm:$0xff]
    %v1612 = vld [vmem:[#allocation11 + $0x1e8] sm:$0xff]
    %v1613 = vld [vmem:[#allocation11 + $0x1f0] sm:$0xff]
    %v1614 = vld [vmem:[#allocation11 + $0x1f8] sm:$0xff]
    %v1615 = vld [vmem:[#allocation11 + $0x200] sm:$0xff]
    %v1616 = vld [vmem:[#allocation11 + $0x208] sm:$0xff]
    %v1617 = vld [vmem:[#allocation11 + $0x210] sm:$0xff]
    %v1618 = vld [vmem:[#allocation11 + $0x218] sm:$0xff]
    %v1619 = vld [vmem:[#allocation11 + $0x220] sm:$0xff]
    %v1620 = vld [vmem:[#allocation11 + $0x228] sm:$0xff]
    %v1621 = vld [vmem:[#allocation11 + $0x230] sm:$0xff]
    %v1622 = vld [vmem:[#allocation11 + $0x238] sm:$0xff]
    %v1623 = vld [vmem:[#allocation11 + $0x240] sm:$0xff]
    %v1624 = vld [vmem:[#allocation11 + $0x248] sm:$0xff]
    %v1625 = vld [vmem:[#allocation11 + $0x250] sm:$0xff]
    %v1626 = vld [vmem:[#allocation11 + $0x258] sm:$0xff]
    %v1627 = vld [vmem:[#allocation11 + $0x260] sm:$0xff]
    %v1628 = vld [vmem:[#allocation11 + $0x268] sm:$0xff]
    %v1629 = vld [vmem:[#allocation11 + $0x270] sm:$0xff]
    %v1630 = vld [vmem:[#allocation11 + $0x278] sm:$0xff]
    %v1631 = vld [vmem:[#allocation11 + $0x280] sm:$0xff]
    %v1632 = vld [vmem:[#allocation11 + $0x288] sm:$0xff]
    %v1633 = vld [vmem:[#allocation11 + $0x290] sm:$0xff]
    %v1634 = vld [vmem:[#allocation11 + $0x298] sm:$0xff]
    %v1635 = vld [vmem:[#allocation11 + $0x2a0] sm:$0xff]
    %v1636 = vld [vmem:[#allocation11 + $0x2a8] sm:$0xff]
    %v1637 = vld [vmem:[#allocation11 + $0x2b0] sm:$0xff]
    %v1638 = vld [vmem:[#allocation11 + $0x2b8] sm:$0xff]
    %v1639 = vld [vmem:[#allocation11 + $0x2c0] sm:$0xff]
    %v1640 = vld [vmem:[#allocation11 + $0x2c8] sm:$0xff]
    %v1641 = vld [vmem:[#allocation11 + $0x2d0] sm:$0xff]
    %v1642 = vld [vmem:[#allocation11 + $0x2d8] sm:$0xff]
    %v1643 = vld [vmem:[#allocation11 + $0x2e0] sm:$0xff]
    %v1644 = vld [vmem:[#allocation11 + $0x2e8] sm:$0xff]
    %v1645 = vld [vmem:[#allocation11 + $0x2f0] sm:$0xff]
    %v1646 = vld [vmem:[#allocation11 + $0x2f8] sm:$0xff]
    %v1647 = vld [vmem:[#allocation11 + $0x300] sm:$0xff]
    %v1648 = vld [vmem:[#allocation11 + $0x308] sm:$0xff]
    %v1649 = vld [vmem:[#allocation11 + $0x310] sm:$0xff]
    %v1650 = vld [vmem:[#allocation11 + $0x318] sm:$0xff]
    %v1651 = vld [vmem:[#allocation11 + $0x320] sm:$0xff]
    %v1652 = vld [vmem:[#allocation11 + $0x328] sm:$0xff]
    %v1653 = vld [vmem:[#allocation11 + $0x330] sm:$0xff]
    %v1654 = vld [vmem:[#allocation11 + $0x338] sm:$0xff]
    %v1655 = vld [vmem:[#allocation11 + $0x340] sm:$0xff]
    %v1656 = vld [vmem:[#allocation11 + $0x348] sm:$0xff]
    %v1657 = vld [vmem:[#allocation11 + $0x350] sm:$0xff]
    %v1658 = vld [vmem:[#allocation11 + $0x358] sm:$0xff]
    %v1659 = vld [vmem:[#allocation11 + $0x360] sm:$0xff]
    %v1660 = vld [vmem:[#allocation11 + $0x368] sm:$0xff]
    %v1661 = vld [vmem:[#allocation11 + $0x370] sm:$0xff]
    %v1662 = vld [vmem:[#allocation11 + $0x378] sm:$0xff]
    %v1663 = vld [vmem:[#allocation11 + $0x380] sm:$0xff]
    %v1664 = vld [vmem:[#allocation11 + $0x388] sm:$0xff]
    %v1665 = vld [vmem:[#allocation11 + $0x390] sm:$0xff]
    %v1666 = vld [vmem:[#allocation11 + $0x398] sm:$0xff]
    %v1667 = vld [vmem:[#allocation11 + $0x3a0] sm:$0xff]
    %v1668 = vld [vmem:[#allocation11 + $0x3a8] sm:$0xff]
    %v1669 = vld [vmem:[#allocation11 + $0x3b0] sm:$0xff]
    %v1670 = vld [vmem:[#allocation11 + $0x3b8] sm:$0xff]
    %v1671 = vld [vmem:[#allocation11 + $0x3c0] sm:$0xff]
    %v1672 = vld [vmem:[#allocation11 + $0x3c8] sm:$0xff]
    %v1673 = vld [vmem:[#allocation11 + $0x3d0] sm:$0xff]
    %v1674 = vld [vmem:[#allocation11 + $0x3d8] sm:$0xff]
    %v1675 = vld [vmem:[#allocation11 + $0x3e0] sm:$0xff]
    %v1676 = vld [vmem:[#allocation11 + $0x3e8] sm:$0xff]
    %v1677 = vld [vmem:[#allocation11 + $0x3f0] sm:$0xff]
    %v1678 = vld [vmem:[#allocation11 + $0x3f8] sm:$0xff]
    %v1679 = vld [vmem:[%s9] sm:$0xff]
    %v1681 = vlaneseq
    %v1682 = vshrl.u32 %v1681, 7
    %v1683 = vsub.s32 0, %v1682
    %v1684 = vrot.slane %v1679, %v1683
    %v1685 = vlaneseq
    %v1686 = vshrl.u32 %v1685, 7
    %v1687 = vsub.s32 1, %v1686
    %v1688 = vrot.slane %v1679, %v1687
    %v1689 = vlaneseq
    %v1690 = vshrl.u32 %v1689, 7
    %v1691 = vsub.s32 2, %v1690
    %v1692 = vrot.slane %v1679, %v1691
    %v1693 = vlaneseq
    %v1694 = vshrl.u32 %v1693, 7
    %v1695 = vsub.s32 3, %v1694
    %v1696 = vrot.slane %v1679, %v1695
    %v1697 = vlaneseq
    %v1698 = vshrl.u32 %v1697, 7
    %v1699 = vsub.s32 4, %v1698
    %v1700 = vrot.slane %v1679, %v1699
    %v1701 = vlaneseq
    %v1702 = vshrl.u32 %v1701, 7
    %v1703 = vsub.s32 5, %v1702
    %v1704 = vrot.slane %v1679, %v1703
    %v1705 = vlaneseq
    %v1706 = vshrl.u32 %v1705, 7
    %v1707 = vsub.s32 6, %v1706
    %v1708 = vrot.slane %v1679, %v1707
    %v1709 = vlaneseq
    %v1710 = vshrl.u32 %v1709, 7
    %v1711 = vsub.s32 7, %v1710
    %v1712 = vrot.slane %v1679, %v1711
    %v1849 = vunpack.c.l.b16 %v1551
    %v1850 = vunpack.c.h.b16 %v1551
    %v1851 = vunpack.c.l.b16 %v1552
    %v1852 = vunpack.c.h.b16 %v1552
    %v1853 = vunpack.c.l.b16 %v1553
    %v1854 = vunpack.c.h.b16 %v1553
    %v1855 = vunpack.c.l.b16 %v1554
    %v1856 = vunpack.c.h.b16 %v1554
    %v1857 = vunpack.c.l.b16 %v1555
    %v1858 = vunpack.c.h.b16 %v1555
    %v1859 = vunpack.c.l.b16 %v1556
    %v1860 = vunpack.c.h.b16 %v1556
    %v1861 = vunpack.c.l.b16 %v1557
    %v1862 = vunpack.c.h.b16 %v1557
    %v1863 = vunpack.c.l.b16 %v1558
    %v1864 = vunpack.c.h.b16 %v1558
    %v1865 = vunpack.c.l.b16 %v1559
    %v1866 = vunpack.c.h.b16 %v1559
    %v1867 = vunpack.c.l.b16 %v1560
    %v1868 = vunpack.c.h.b16 %v1560
    %v1869 = vunpack.c.l.b16 %v1561
    %v1870 = vunpack.c.h.b16 %v1561
    %v1871 = vunpack.c.l.b16 %v1562
    %v1872 = vunpack.c.h.b16 %v1562
    %v1873 = vunpack.c.l.b16 %v1563
    %v1874 = vunpack.c.h.b16 %v1563
    %v1875 = vunpack.c.l.b16 %v1564
    %v1876 = vunpack.c.h.b16 %v1564
    %v1877 = vunpack.c.l.b16 %v1565
    %v1878 = vunpack.c.h.b16 %v1565
    %v1879 = vunpack.c.l.b16 %v1566
    %v1880 = vunpack.c.h.b16 %v1566
    %v1881 = vunpack.c.l.b16 %v1567
    %v1882 = vunpack.c.h.b16 %v1567
    %v1883 = vunpack.c.l.b16 %v1568
    %v1884 = vunpack.c.h.b16 %v1568
    %v1885 = vunpack.c.l.b16 %v1569
    %v1886 = vunpack.c.h.b16 %v1569
    %v1887 = vunpack.c.l.b16 %v1570
    %v1888 = vunpack.c.h.b16 %v1570
    %v1889 = vunpack.c.l.b16 %v1571
    %v1890 = vunpack.c.h.b16 %v1571
    %v1891 = vunpack.c.l.b16 %v1572
    %v1892 = vunpack.c.h.b16 %v1572
    %v1893 = vunpack.c.l.b16 %v1573
    %v1894 = vunpack.c.h.b16 %v1573
    %v1895 = vunpack.c.l.b16 %v1574
    %v1896 = vunpack.c.h.b16 %v1574
    %v1897 = vunpack.c.l.b16 %v1575
    %v1898 = vunpack.c.h.b16 %v1575
    %v1899 = vunpack.c.l.b16 %v1576
    %v1900 = vunpack.c.h.b16 %v1576
    %v1901 = vunpack.c.l.b16 %v1577
    %v1902 = vunpack.c.h.b16 %v1577
    %v1903 = vunpack.c.l.b16 %v1578
    %v1904 = vunpack.c.h.b16 %v1578
    %v1905 = vunpack.c.l.b16 %v1579
    %v1906 = vunpack.c.h.b16 %v1579
    %v1907 = vunpack.c.l.b16 %v1580
    %v1908 = vunpack.c.h.b16 %v1580
    %v1909 = vunpack.c.l.b16 %v1581
    %v1910 = vunpack.c.h.b16 %v1581
    %v1911 = vunpack.c.l.b16 %v1582
    %v1912 = vunpack.c.h.b16 %v1582
    %v1913 = vunpack.c.l.b16 %v1583
    %v1914 = vunpack.c.h.b16 %v1583
    %v1915 = vunpack.c.l.b16 %v1584
    %v1916 = vunpack.c.h.b16 %v1584
    %v1917 = vunpack.c.l.b16 %v1585
    %v1918 = vunpack.c.h.b16 %v1585
    %v1919 = vunpack.c.l.b16 %v1586
    %v1920 = vunpack.c.h.b16 %v1586
    %v1921 = vunpack.c.l.b16 %v1587
    %v1922 = vunpack.c.h.b16 %v1587
    %v1923 = vunpack.c.l.b16 %v1588
    %v1924 = vunpack.c.h.b16 %v1588
    %v1925 = vunpack.c.l.b16 %v1589
    %v1926 = vunpack.c.h.b16 %v1589
    %v1927 = vunpack.c.l.b16 %v1590
    %v1928 = vunpack.c.h.b16 %v1590
    %v1929 = vunpack.c.l.b16 %v1591
    %v1930 = vunpack.c.h.b16 %v1591
    %v1931 = vunpack.c.l.b16 %v1592
    %v1932 = vunpack.c.h.b16 %v1592
    %v1933 = vunpack.c.l.b16 %v1593
    %v1934 = vunpack.c.h.b16 %v1593
    %v1935 = vunpack.c.l.b16 %v1594
    %v1936 = vunpack.c.h.b16 %v1594
    %v1937 = vunpack.c.l.b16 %v1595
    %v1938 = vunpack.c.h.b16 %v1595
    %v1939 = vunpack.c.l.b16 %v1596
    %v1940 = vunpack.c.h.b16 %v1596
    %v1941 = vunpack.c.l.b16 %v1597
    %v1942 = vunpack.c.h.b16 %v1597
    %v1943 = vunpack.c.l.b16 %v1598
    %v1944 = vunpack.c.h.b16 %v1598
    %v1945 = vunpack.c.l.b16 %v1599
    %v1946 = vunpack.c.h.b16 %v1599
    %v1947 = vunpack.c.l.b16 %v1600
    %v1948 = vunpack.c.h.b16 %v1600
    %v1949 = vunpack.c.l.b16 %v1601
    %v1950 = vunpack.c.h.b16 %v1601
    %v1951 = vunpack.c.l.b16 %v1602
    %v1952 = vunpack.c.h.b16 %v1602
    %v1953 = vunpack.c.l.b16 %v1603
    %v1954 = vunpack.c.h.b16 %v1603
    %v1955 = vunpack.c.l.b16 %v1604
    %v1956 = vunpack.c.h.b16 %v1604
    %v1957 = vunpack.c.l.b16 %v1605
    %v1958 = vunpack.c.h.b16 %v1605
    %v1959 = vunpack.c.l.b16 %v1606
    %v1960 = vunpack.c.h.b16 %v1606
    %v1961 = vunpack.c.l.b16 %v1607
    %v1962 = vunpack.c.h.b16 %v1607
    %v1963 = vunpack.c.l.b16 %v1608
    %v1964 = vunpack.c.h.b16 %v1608
    %v1965 = vunpack.c.l.b16 %v1609
    %v1966 = vunpack.c.h.b16 %v1609
    %v1967 = vunpack.c.l.b16 %v1610
    %v1968 = vunpack.c.h.b16 %v1610
    %v1969 = vunpack.c.l.b16 %v1611
    %v1970 = vunpack.c.h.b16 %v1611
    %v1971 = vunpack.c.l.b16 %v1612
    %v1972 = vunpack.c.h.b16 %v1612
    %v1973 = vunpack.c.l.b16 %v1613
    %v1974 = vunpack.c.h.b16 %v1613
    %v1975 = vunpack.c.l.b16 %v1614
    %v1976 = vunpack.c.h.b16 %v1614
    %v1977 = vunpack.c.l.b16 %v1615
    %v1978 = vunpack.c.h.b16 %v1615
    %v1979 = vunpack.c.l.b16 %v1616
    %v1980 = vunpack.c.h.b16 %v1616
    %v1981 = vunpack.c.l.b16 %v1617
    %v1982 = vunpack.c.h.b16 %v1617
    %v1983 = vunpack.c.l.b16 %v1618
    %v1984 = vunpack.c.h.b16 %v1618
    %v1985 = vunpack.c.l.b16 %v1619
    %v1986 = vunpack.c.h.b16 %v1619
    %v1987 = vunpack.c.l.b16 %v1620
    %v1988 = vunpack.c.h.b16 %v1620
    %v1989 = vunpack.c.l.b16 %v1621
    %v1990 = vunpack.c.h.b16 %v1621
    %v1991 = vunpack.c.l.b16 %v1622
    %v1992 = vunpack.c.h.b16 %v1622
    %v1993 = vunpack.c.l.b16 %v1623
    %v1994 = vunpack.c.h.b16 %v1623
    %v1995 = vunpack.c.l.b16 %v1624
    %v1996 = vunpack.c.h.b16 %v1624
    %v1997 = vunpack.c.l.b16 %v1625
    %v1998 = vunpack.c.h.b16 %v1625
    %v1999 = vunpack.c.l.b16 %v1626
    %v2000 = vunpack.c.h.b16 %v1626
    %v2001 = vunpack.c.l.b16 %v1627
    %v2002 = vunpack.c.h.b16 %v1627
    %v2003 = vunpack.c.l.b16 %v1628
    %v2004 = vunpack.c.h.b16 %v1628
    %v2005 = vunpack.c.l.b16 %v1629
    %v2006 = vunpack.c.h.b16 %v1629
    %v2007 = vunpack.c.l.b16 %v1630
    %v2008 = vunpack.c.h.b16 %v1630
    %v2009 = vunpack.c.l.b16 %v1631
    %v2010 = vunpack.c.h.b16 %v1631
    %v2011 = vunpack.c.l.b16 %v1632
    %v2012 = vunpack.c.h.b16 %v1632
    %v2013 = vunpack.c.l.b16 %v1633
    %v2014 = vunpack.c.h.b16 %v1633
    %v2015 = vunpack.c.l.b16 %v1634
    %v2016 = vunpack.c.h.b16 %v1634
    %v2017 = vunpack.c.l.b16 %v1635
    %v2018 = vunpack.c.h.b16 %v1635
    %v2019 = vunpack.c.l.b16 %v1636
    %v2020 = vunpack.c.h.b16 %v1636
    %v2021 = vunpack.c.l.b16 %v1637
    %v2022 = vunpack.c.h.b16 %v1637
    %v2023 = vunpack.c.l.b16 %v1638
    %v2024 = vunpack.c.h.b16 %v1638
    %v2025 = vunpack.c.l.b16 %v1639
    %v2026 = vunpack.c.h.b16 %v1639
    %v2027 = vunpack.c.l.b16 %v1640
    %v2028 = vunpack.c.h.b16 %v1640
    %v2029 = vunpack.c.l.b16 %v1641
    %v2030 = vunpack.c.h.b16 %v1641
    %v2031 = vunpack.c.l.b16 %v1642
    %v2032 = vunpack.c.h.b16 %v1642
    %v2033 = vunpack.c.l.b16 %v1643
    %v2034 = vunpack.c.h.b16 %v1643
    %v2035 = vunpack.c.l.b16 %v1644
    %v2036 = vunpack.c.h.b16 %v1644
    %v2037 = vunpack.c.l.b16 %v1645
    %v2038 = vunpack.c.h.b16 %v1645
    %v2039 = vunpack.c.l.b16 %v1646
    %v2040 = vunpack.c.h.b16 %v1646
    %v2041 = vunpack.c.l.b16 %v1647
    %v2042 = vunpack.c.h.b16 %v1647
    %v2043 = vunpack.c.l.b16 %v1648
    %v2044 = vunpack.c.h.b16 %v1648
    %v2045 = vunpack.c.l.b16 %v1649
    %v2046 = vunpack.c.h.b16 %v1649
    %v2047 = vunpack.c.l.b16 %v1650
    %v2048 = vunpack.c.h.b16 %v1650
    %v2049 = vunpack.c.l.b16 %v1651
    %v2050 = vunpack.c.h.b16 %v1651
    %v2051 = vunpack.c.l.b16 %v1652
    %v2052 = vunpack.c.h.b16 %v1652
    %v2053 = vunpack.c.l.b16 %v1653
    %v2054 = vunpack.c.h.b16 %v1653
    %v2055 = vunpack.c.l.b16 %v1654
    %v2056 = vunpack.c.h.b16 %v1654
    %v2057 = vunpack.c.l.b16 %v1655
    %v2058 = vunpack.c.h.b16 %v1655
    %v2059 = vunpack.c.l.b16 %v1656
    %v2060 = vunpack.c.h.b16 %v1656
    %v2061 = vunpack.c.l.b16 %v1657
    %v2062 = vunpack.c.h.b16 %v1657
    %v2063 = vunpack.c.l.b16 %v1658
    %v2064 = vunpack.c.h.b16 %v1658
    %v2065 = vunpack.c.l.b16 %v1659
    %v2066 = vunpack.c.h.b16 %v1659
    %v2067 = vunpack.c.l.b16 %v1660
    %v2068 = vunpack.c.h.b16 %v1660
    %v2069 = vunpack.c.l.b16 %v1661
    %v2070 = vunpack.c.h.b16 %v1661
    %v2071 = vunpack.c.l.b16 %v1662
    %v2072 = vunpack.c.h.b16 %v1662
    %v2073 = vunpack.c.l.b16 %v1663
    %v2074 = vunpack.c.h.b16 %v1663
    %v2075 = vunpack.c.l.b16 %v1664
    %v2076 = vunpack.c.h.b16 %v1664
    %v2077 = vunpack.c.l.b16 %v1665
    %v2078 = vunpack.c.h.b16 %v1665
    %v2079 = vunpack.c.l.b16 %v1666
    %v2080 = vunpack.c.h.b16 %v1666
    %v2081 = vunpack.c.l.b16 %v1667
    %v2082 = vunpack.c.h.b16 %v1667
    %v2083 = vunpack.c.l.b16 %v1668
    %v2084 = vunpack.c.h.b16 %v1668
    %v2085 = vunpack.c.l.b16 %v1669
    %v2086 = vunpack.c.h.b16 %v1669
    %v2087 = vunpack.c.l.b16 %v1670
    %v2088 = vunpack.c.h.b16 %v1670
    %v2089 = vunpack.c.l.b16 %v1671
    %v2090 = vunpack.c.h.b16 %v1671
    %v2091 = vunpack.c.l.b16 %v1672
    %v2092 = vunpack.c.h.b16 %v1672
    %v2093 = vunpack.c.l.b16 %v1673
    %v2094 = vunpack.c.h.b16 %v1673
    %v2095 = vunpack.c.l.b16 %v1674
    %v2096 = vunpack.c.h.b16 %v1674
    %v2097 = vunpack.c.l.b16 %v1675
    %v2098 = vunpack.c.h.b16 %v1675
    %v2099 = vunpack.c.l.b16 %v1676
    %v2100 = vunpack.c.h.b16 %v1676
    %v2101 = vunpack.c.l.b16 %v1677
    %v2102 = vunpack.c.h.b16 %v1677
    %v2103 = vunpack.c.l.b16 %v1678
    %v2104 = vunpack.c.h.b16 %v1678
    %v2105 = vpack.c.b16 %v1857, %v1849
    %v2106 = vpack.c.b16 %v1858, %v1850
    %v2107 = vpack.c.b16 %v1859, %v1851
    %v2108 = vpack.c.b16 %v1860, %v1852
    %v2109 = vpack.c.b16 %v1861, %v1853
    %v2110 = vpack.c.b16 %v1862, %v1854
    %v2111 = vpack.c.b16 %v1863, %v1855
    %v2112 = vpack.c.b16 %v1864, %v1856
    %v2113 = vpack.c.b16 %v1873, %v1865
    %v2114 = vpack.c.b16 %v1874, %v1866
    %v2115 = vpack.c.b16 %v1875, %v1867
    %v2116 = vpack.c.b16 %v1876, %v1868
    %v2117 = vpack.c.b16 %v1877, %v1869
    %v2118 = vpack.c.b16 %v1878, %v1870
    %v2119 = vpack.c.b16 %v1879, %v1871
    %v2120 = vpack.c.b16 %v1880, %v1872
    %v2121 = vpack.c.b16 %v1889, %v1881
    %v2122 = vpack.c.b16 %v1890, %v1882
    %v2123 = vpack.c.b16 %v1891, %v1883
    %v2124 = vpack.c.b16 %v1892, %v1884
    %v2125 = vpack.c.b16 %v1893, %v1885
    %v2126 = vpack.c.b16 %v1894, %v1886
    %v2127 = vpack.c.b16 %v1895, %v1887
    %v2128 = vpack.c.b16 %v1896, %v1888
    %v2129 = vpack.c.b16 %v1905, %v1897
    %v2130 = vpack.c.b16 %v1906, %v1898
    %v2131 = vpack.c.b16 %v1907, %v1899
    %v2132 = vpack.c.b16 %v1908, %v1900
    %v2133 = vpack.c.b16 %v1909, %v1901
    %v2134 = vpack.c.b16 %v1910, %v1902
    %v2135 = vpack.c.b16 %v1911, %v1903
    %v2136 = vpack.c.b16 %v1912, %v1904
    %v2137 = vpack.c.b16 %v1921, %v1913
    %v2138 = vpack.c.b16 %v1922, %v1914
    %v2139 = vpack.c.b16 %v1923, %v1915
    %v2140 = vpack.c.b16 %v1924, %v1916
    %v2141 = vpack.c.b16 %v1925, %v1917
    %v2142 = vpack.c.b16 %v1926, %v1918
    %v2143 = vpack.c.b16 %v1927, %v1919
    %v2144 = vpack.c.b16 %v1928, %v1920
    %v2145 = vpack.c.b16 %v1937, %v1929
    %v2146 = vpack.c.b16 %v1938, %v1930
    %v2147 = vpack.c.b16 %v1939, %v1931
    %v2148 = vpack.c.b16 %v1940, %v1932
    %v2149 = vpack.c.b16 %v1941, %v1933
    %v2150 = vpack.c.b16 %v1942, %v1934
    %v2151 = vpack.c.b16 %v1943, %v1935
    %v2152 = vpack.c.b16 %v1944, %v1936
    %v2153 = vpack.c.b16 %v1953, %v1945
    %v2154 = vpack.c.b16 %v1954, %v1946
    %v2155 = vpack.c.b16 %v1955, %v1947
    %v2156 = vpack.c.b16 %v1956, %v1948
    %v2157 = vpack.c.b16 %v1957, %v1949
    %v2158 = vpack.c.b16 %v1958, %v1950
    %v2159 = vpack.c.b16 %v1959, %v1951
    %v2160 = vpack.c.b16 %v1960, %v1952
    %v2161 = vpack.c.b16 %v1969, %v1961
    %v2162 = vpack.c.b16 %v1970, %v1962
    %v2163 = vpack.c.b16 %v1971, %v1963
    %v2164 = vpack.c.b16 %v1972, %v1964
    %v2165 = vpack.c.b16 %v1973, %v1965
    %v2166 = vpack.c.b16 %v1974, %v1966
    %v2167 = vpack.c.b16 %v1975, %v1967
    %v2168 = vpack.c.b16 %v1976, %v1968
    %v2169 = vpack.c.b16 %v1985, %v1977
    %v2170 = vpack.c.b16 %v1986, %v1978
    %v2171 = vpack.c.b16 %v1987, %v1979
    %v2172 = vpack.c.b16 %v1988, %v1980
    %v2173 = vpack.c.b16 %v1989, %v1981
    %v2174 = vpack.c.b16 %v1990, %v1982
    %v2175 = vpack.c.b16 %v1991, %v1983
    %v2176 = vpack.c.b16 %v1992, %v1984
    %v2177 = vpack.c.b16 %v2001, %v1993
    %v2178 = vpack.c.b16 %v2002, %v1994
    %v2179 = vpack.c.b16 %v2003, %v1995
    %v2180 = vpack.c.b16 %v2004, %v1996
    %v2181 = vpack.c.b16 %v2005, %v1997
    %v2182 = vpack.c.b16 %v2006, %v1998
    %v2183 = vpack.c.b16 %v2007, %v1999
    %v2184 = vpack.c.b16 %v2008, %v2000
    %v2185 = vpack.c.b16 %v2017, %v2009
    %v2186 = vpack.c.b16 %v2018, %v2010
    %v2187 = vpack.c.b16 %v2019, %v2011
    %v2188 = vpack.c.b16 %v2020, %v2012
    %v2189 = vpack.c.b16 %v2021, %v2013
    %v2190 = vpack.c.b16 %v2022, %v2014
    %v2191 = vpack.c.b16 %v2023, %v2015
    %v2192 = vpack.c.b16 %v2024, %v2016
    %v2193 = vpack.c.b16 %v2033, %v2025
    %v2194 = vpack.c.b16 %v2034, %v2026
    %v2195 = vpack.c.b16 %v2035, %v2027
    %v2196 = vpack.c.b16 %v2036, %v2028
    %v2197 = vpack.c.b16 %v2037, %v2029
    %v2198 = vpack.c.b16 %v2038, %v2030
    %v2199 = vpack.c.b16 %v2039, %v2031
    %v2200 = vpack.c.b16 %v2040, %v2032
    %v2201 = vpack.c.b16 %v2049, %v2041
    %v2202 = vpack.c.b16 %v2050, %v2042
    %v2203 = vpack.c.b16 %v2051, %v2043
    %v2204 = vpack.c.b16 %v2052, %v2044
    %v2205 = vpack.c.b16 %v2053, %v2045
    %v2206 = vpack.c.b16 %v2054, %v2046
    %v2207 = vpack.c.b16 %v2055, %v2047
    %v2208 = vpack.c.b16 %v2056, %v2048
    %v2209 = vpack.c.b16 %v2065, %v2057
    %v2210 = vpack.c.b16 %v2066, %v2058
    %v2211 = vpack.c.b16 %v2067, %v2059
    %v2212 = vpack.c.b16 %v2068, %v2060
    %v2213 = vpack.c.b16 %v2069, %v2061
    %v2214 = vpack.c.b16 %v2070, %v2062
    %v2215 = vpack.c.b16 %v2071, %v2063
    %v2216 = vpack.c.b16 %v2072, %v2064
    %v2217 = vpack.c.b16 %v2081, %v2073
    %v2218 = vpack.c.b16 %v2082, %v2074
    %v2219 = vpack.c.b16 %v2083, %v2075
    %v2220 = vpack.c.b16 %v2084, %v2076
    %v2221 = vpack.c.b16 %v2085, %v2077
    %v2222 = vpack.c.b16 %v2086, %v2078
    %v2223 = vpack.c.b16 %v2087, %v2079
    %v2224 = vpack.c.b16 %v2088, %v2080
    %v2225 = vpack.c.b16 %v2097, %v2089
    %v2226 = vpack.c.b16 %v2098, %v2090
    %v2227 = vpack.c.b16 %v2099, %v2091
    %v2228 = vpack.c.b16 %v2100, %v2092
    %v2229 = vpack.c.b16 %v2101, %v2093
    %v2230 = vpack.c.b16 %v2102, %v2094
    %v2231 = vpack.c.b16 %v2103, %v2095
    %v2232 = vpack.c.b16 %v2104, %v2096
    %2361 = vmatprep.subr.bf16.mxu0 %v2162
    %2362 = vmatpush1.bf16.msra.mxu0 %v2161
    %2363 = vmatprep.subr.bf16.mxu0 %v2154
    %2364 = vmatpush1.bf16.msra.mxu0 %v2153
    %2365 = vmatprep.subr.bf16.mxu0 %v2146
    %2366 = vmatpush1.bf16.msra.mxu0 %v2145
    %2367 = vmatprep.subr.bf16.mxu0 %v2138
    %2368 = vmatpush1.bf16.msra.mxu0 %v2137
    %2369 = vmatprep.subr.bf16.mxu0 %v2130
    %2370 = vmatpush1.bf16.msra.mxu0 %v2129
    %2371 = vmatprep.subr.bf16.mxu0 %v2122
    %2372 = vmatpush1.bf16.msra.mxu0 %v2121
    %2373 = vmatprep.subr.bf16.mxu0 %v2114
    %2374 = vmatpush1.bf16.msra.mxu0 %v2113
    %2375 = vmatprep.subr.bf16.mxu0 %v2106
    %2376 = vmatpush1.bf16.msra.mxu0 %v2105
    %2377 = vmatprep.subr.bf16.mxu0 %v2226
    %2378 = vmatpush2.bf16.msra.mxu0 %v2225
    %2379 = vmatprep.subr.bf16.mxu0 %v2218
    %2380 = vmatpush2.bf16.msra.mxu0 %v2217
    %2381 = vmatprep.subr.bf16.mxu0 %v2210
    %2382 = vmatpush2.bf16.msra.mxu0 %v2209
    %2383 = vmatprep.subr.bf16.mxu0 %v2202
    %2384 = vmatpush2.bf16.msra.mxu0 %v2201
    %2385 = vmatprep.subr.bf16.mxu0 %v2194
    %2386 = vmatpush2.bf16.msra.mxu0 %v2193
    %2387 = vmatprep.subr.bf16.mxu0 %v2186
    %2388 = vmatpush2.bf16.msra.mxu0 %v2185
    %2389 = vmatprep.subr.bf16.mxu0 %v2178
    %2390 = vmatpush2.bf16.msra.mxu0 %v2177
    %2391 = vmatprep.subr.bf16.mxu0 %v2170
    %2392 = vmatpush2.bf16.msra.mxu0 %v2169
    %2393 = vmatprep.mubr.bf16.mxu0 %v1550
    %2394 = vmatmul.mubr.bf16.gmra.mxu0 %v1549
    %v2395 = vpop.f32.mrf.mxu0
    %v2396 = vadd.f32 %v1684, %v2395
    %v2397 = vpop.f32.mrf.mxu0
    %v2398 = vadd.f32 %v1688, %v2397
    %v2399 = vpop.f32.mrf.mxu0
    %v2400 = vadd.f32 %v1684, %v2399
    %v2401 = vpop.f32.mrf.mxu0
    %v2402 = vadd.f32 %v1688, %v2401
    %2403 = vdwg.mxu0
    %2404 = vmatprep.subr.bf16.mxu0 %v2164
    %2405 = vmatpush1.bf16.msra.mxu0 %v2163
    %2406 = vmatprep.subr.bf16.mxu0 %v2156
    %2407 = vmatpush1.bf16.msra.mxu0 %v2155
    %2408 = vmatprep.subr.bf16.mxu0 %v2148
    %2409 = vmatpush1.bf16.msra.mxu0 %v2147
    %2410 = vmatprep.subr.bf16.mxu0 %v2140
    %2411 = vmatpush1.bf16.msra.mxu0 %v2139
    %2412 = vmatprep.subr.bf16.mxu0 %v2132
    %2413 = vmatpush1.bf16.msra.mxu0 %v2131
    %2414 = vmatprep.subr.bf16.mxu0 %v2124
    %2415 = vmatpush1.bf16.msra.mxu0 %v2123
    %2416 = vmatprep.subr.bf16.mxu0 %v2116
    %2417 = vmatpush1.bf16.msra.mxu0 %v2115
    %2418 = vmatprep.subr.bf16.mxu0 %v2108
    %2419 = vmatpush1.bf16.msra.mxu0 %v2107
    %2420 = vmatprep.subr.bf16.mxu0 %v2228
    %2421 = vmatpush2.bf16.msra.mxu0 %v2227
    %2422 = vmatprep.subr.bf16.mxu0 %v2220
    %2423 = vmatpush2.bf16.msra.mxu0 %v2219
    %2424 = vmatprep.subr.bf16.mxu0 %v2212
    %2425 = vmatpush2.bf16.msra.mxu0 %v2211
    %2426 = vmatprep.subr.bf16.mxu0 %v2204
    %2427 = vmatpush2.bf16.msra.mxu0 %v2203
    %2428 = vmatprep.subr.bf16.mxu0 %v2196
    %2429 = vmatpush2.bf16.msra.mxu0 %v2195
    %2430 = vmatprep.subr.bf16.mxu0 %v2188
    %2431 = vmatpush2.bf16.msra.mxu0 %v2187
    %2432 = vmatprep.subr.bf16.mxu0 %v2180
    %2433 = vmatpush2.bf16.msra.mxu0 %v2179
    %2434 = vmatprep.subr.bf16.mxu0 %v2172
    %2435 = vmatpush2.bf16.msra.mxu0 %v2171
    %2436 = vmatprep.mubr.bf16.mxu0 %v1550
    %2437 = vmatmul.mubr.bf16.gmra.mxu0 %v1549
    %v2438 = vpop.f32.mrf.mxu0
    %v2439 = vadd.f32 %v1692, %v2438
    %v2440 = vpop.f32.mrf.mxu0
    %v2441 = vadd.f32 %v1696, %v2440
    %v2442 = vpop.f32.mrf.mxu0
    %v2443 = vadd.f32 %v1692, %v2442
    %v2444 = vpop.f32.mrf.mxu0
    %v2445 = vadd.f32 %v1696, %v2444
    %2446 = vdwg.mxu0
    %2447 = vmatprep.subr.bf16.mxu0 %v2166
    %2448 = vmatpush1.bf16.msra.mxu0 %v2165
    %2449 = vmatprep.subr.bf16.mxu0 %v2158
    %2450 = vmatpush1.bf16.msra.mxu0 %v2157
    %2451 = vmatprep.subr.bf16.mxu0 %v2150
    %2452 = vmatpush1.bf16.msra.mxu0 %v2149
    %2453 = vmatprep.subr.bf16.mxu0 %v2142
    %2454 = vmatpush1.bf16.msra.mxu0 %v2141
    %2455 = vmatprep.subr.bf16.mxu0 %v2134
    %2456 = vmatpush1.bf16.msra.mxu0 %v2133
    %2457 = vmatprep.subr.bf16.mxu0 %v2126
    %2458 = vmatpush1.bf16.msra.mxu0 %v2125
    %2459 = vmatprep.subr.bf16.mxu0 %v2118
    %2460 = vmatpush1.bf16.msra.mxu0 %v2117
    %2461 = vmatprep.subr.bf16.mxu0 %v2110
    %2462 = vmatpush1.bf16.msra.mxu0 %v2109
    %2463 = vmatprep.subr.bf16.mxu0 %v2230
    %2464 = vmatpush2.bf16.msra.mxu0 %v2229
    %2465 = vmatprep.subr.bf16.mxu0 %v2222
    %2466 = vmatpush2.bf16.msra.mxu0 %v2221
    %2467 = vmatprep.subr.bf16.mxu0 %v2214
    %2468 = vmatpush2.bf16.msra.mxu0 %v2213
    %2469 = vmatprep.subr.bf16.mxu0 %v2206
    %2470 = vmatpush2.bf16.msra.mxu0 %v2205
    %2471 = vmatprep.subr.bf16.mxu0 %v2198
    %2472 = vmatpush2.bf16.msra.mxu0 %v2197
    %2473 = vmatprep.subr.bf16.mxu0 %v2190
    %2474 = vmatpush2.bf16.msra.mxu0 %v2189
    %2475 = vmatprep.subr.bf16.mxu0 %v2182
    %2476 = vmatpush2.bf16.msra.mxu0 %v2181
    %2477 = vmatprep.subr.bf16.mxu0 %v2174
    %2478 = vmatpush2.bf16.msra.mxu0 %v2173
    %2479 = vmatprep.mubr.bf16.mxu0 %v1550
    %2480 = vmatmul.mubr.bf16.gmra.mxu0 %v1549
    %v2481 = vpop.f32.mrf.mxu0
    %v2482 = vadd.f32 %v1700, %v2481
    %v2483 = vpop.f32.mrf.mxu0
    %v2484 = vadd.f32 %v1704, %v2483
    %v2485 = vpop.f32.mrf.mxu0
    %v2486 = vadd.f32 %v1700, %v2485
    %v2487 = vpop.f32.mrf.mxu0
    %v2488 = vadd.f32 %v1704, %v2487
    %2489 = vdwg.mxu0
    %2490 = vmatprep.subr.bf16.mxu0 %v2168
    %2491 = vmatpush1.bf16.msra.mxu0 %v2167
    %2492 = vmatprep.subr.bf16.mxu0 %v2160
    %2493 = vmatpush1.bf16.msra.mxu0 %v2159
    %2494 = vmatprep.subr.bf16.mxu0 %v2152
    %2495 = vmatpush1.bf16.msra.mxu0 %v2151
    %2496 = vmatprep.subr.bf16.mxu0 %v2144
    %2497 = vmatpush1.bf16.msra.mxu0 %v2143
    %2498 = vmatprep.subr.bf16.mxu0 %v2136
    %2499 = vmatpush1.bf16.msra.mxu0 %v2135
    %2500 = vmatprep.subr.bf16.mxu0 %v2128
    %2501 = vmatpush1.bf16.msra.mxu0 %v2127
    %2502 = vmatprep.subr.bf16.mxu0 %v2120
    %2503 = vmatpush1.bf16.msra.mxu0 %v2119
    %2504 = vmatprep.subr.bf16.mxu0 %v2112
    %2505 = vmatpush1.bf16.msra.mxu0 %v2111
    %2506 = vmatprep.subr.bf16.mxu0 %v2232
    %2507 = vmatpush2.bf16.msra.mxu0 %v2231
    %2508 = vmatprep.subr.bf16.mxu0 %v2224
    %2509 = vmatpush2.bf16.msra.mxu0 %v2223
    %2510 = vmatprep.subr.bf16.mxu0 %v2216
    %2511 = vmatpush2.bf16.msra.mxu0 %v2215
    %2512 = vmatprep.subr.bf16.mxu0 %v2208
    %2513 = vmatpush2.bf16.msra.mxu0 %v2207
    %2514 = vmatprep.subr.bf16.mxu0 %v2200
    %2515 = vmatpush2.bf16.msra.mxu0 %v2199
    %2516 = vmatprep.subr.bf16.mxu0 %v2192
    %2517 = vmatpush2.bf16.msra.mxu0 %v2191
    %2518 = vmatprep.subr.bf16.mxu0 %v2184
    %2519 = vmatpush2.bf16.msra.mxu0 %v2183
    %2520 = vmatprep.subr.bf16.mxu0 %v2176
    %2521 = vmatpush2.bf16.msra.mxu0 %v2175
    %2522 = vmatprep.mubr.bf16.mxu0 %v1550
    %2523 = vmatmul.mubr.bf16.gmra.mxu0 %v1549
    %v2524 = vpop.f32.mrf.mxu0
    %v2525 = vadd.f32 %v1708, %v2524
    %v2526 = vpop.f32.mrf.mxu0
    %v2527 = vadd.f32 %v1712, %v2526
    %v2528 = vpop.f32.mrf.mxu0
    %v2529 = vadd.f32 %v1708, %v2528
    %v2530 = vpop.f32.mrf.mxu0
    %v2531 = vadd.f32 %v1712, %v2530
    %2532 = vdwg.mxu0
    %v2533 = vxor.u32 %v2396, 2147483648
    %v2534 = vxor.u32 %v2398, 2147483648
    %v2535 = vxor.u32 %v2439, 2147483648
    %v2536 = vxor.u32 %v2441, 2147483648
    %v2537 = vxor.u32 %v2482, 2147483648
    %v2538 = vxor.u32 %v2484, 2147483648
    %v2539 = vxor.u32 %v2525, 2147483648
    %v2540 = vxor.u32 %v2527, 2147483648
    %v2541 = vxor.u32 %v2400, 2147483648
    %v2542 = vxor.u32 %v2402, 2147483648
    %v2543 = vxor.u32 %v2443, 2147483648
    %v2544 = vxor.u32 %v2445, 2147483648
    %v2545 = vxor.u32 %v2486, 2147483648
    %v2546 = vxor.u32 %v2488, 2147483648
    %v2547 = vxor.u32 %v2529, 2147483648
    %v2548 = vxor.u32 %v2531, 2147483648
    %v2549 = vmul.f32 %v2533, 1.442695
    %v2550 = vpow.pop %v2549
    %v2551 = vmul.f32 %v2534, 1.442695
    %v2552 = vpow.pop %v2551
    %v2553 = vmul.f32 %v2535, 1.442695
    %v2554 = vpow.pop %v2553
    %v2555 = vmul.f32 %v2536, 1.442695
    %v2556 = vpow.pop %v2555
    %v2557 = vmul.f32 %v2537, 1.442695
    %v2558 = vpow.pop %v2557
    %v2559 = vmul.f32 %v2538, 1.442695
    %v2560 = vpow.pop %v2559
    %v2561 = vmul.f32 %v2539, 1.442695
    %v2562 = vpow.pop %v2561
    %v2563 = vmul.f32 %v2540, 1.442695
    %v2564 = vpow.pop %v2563
    %v2565 = vmul.f32 %v2541, 1.442695
    %v2566 = vpow.pop %v2565
    %v2567 = vmul.f32 %v2542, 1.442695
    %v2568 = vpow.pop %v2567
    %v2569 = vmul.f32 %v2543, 1.442695
    %v2570 = vpow.pop %v2569
    %v2571 = vmul.f32 %v2544, 1.442695
    %v2572 = vpow.pop %v2571
    %v2573 = vmul.f32 %v2545, 1.442695
    %v2574 = vpow.pop %v2573
    %v2575 = vmul.f32 %v2546, 1.442695
    %v2576 = vpow.pop %v2575
    %v2577 = vmul.f32 %v2547, 1.442695
    %v2578 = vpow.pop %v2577
    %v2579 = vmul.f32 %v2548, 1.442695
    %v2580 = vpow.pop %v2579
    %v2581 = vadd.f32 %v2550, 1.0
    %v2582 = vadd.f32 %v2552, 1.0
    %v2583 = vadd.f32 %v2554, 1.0
    %v2584 = vadd.f32 %v2556, 1.0
    %v2585 = vadd.f32 %v2558, 1.0
    %v2586 = vadd.f32 %v2560, 1.0
    %v2587 = vadd.f32 %v2562, 1.0
    %v2588 = vadd.f32 %v2564, 1.0
    %v2589 = vadd.f32 %v2566, 1.0
    %v2590 = vadd.f32 %v2568, 1.0
    %v2591 = vadd.f32 %v2570, 1.0
    %v2592 = vadd.f32 %v2572, 1.0
    %v2593 = vadd.f32 %v2574, 1.0
    %v2594 = vadd.f32 %v2576, 1.0
    %v2595 = vadd.f32 %v2578, 1.0
    %v2596 = vadd.f32 %v2580, 1.0
    %v2597 = vrcp.pop %v2581
    %v2598 = vmul.f32 1.0, %v2597
    %v2599 = vrcp.pop %v2582
    %v2600 = vmul.f32 1.0, %v2599
    %v2601 = vrcp.pop %v2583
    %v2602 = vmul.f32 1.0, %v2601
    %v2603 = vrcp.pop %v2584
    %v2604 = vmul.f32 1.0, %v2603
    %v2605 = vrcp.pop %v2585
    %v2606 = vmul.f32 1.0, %v2605
    %v2607 = vrcp.pop %v2586
    %v2608 = vmul.f32 1.0, %v2607
    %v2609 = vrcp.pop %v2587
    %v2610 = vmul.f32 1.0, %v2609
    %v2611 = vrcp.pop %v2588
    %v2612 = vmul.f32 1.0, %v2611
    %v2613 = vrcp.pop %v2589
    %v2614 = vmul.f32 1.0, %v2613
    %v2615 = vrcp.pop %v2590
    %v2616 = vmul.f32 1.0, %v2615
    %v2617 = vrcp.pop %v2591
    %v2618 = vmul.f32 1.0, %v2617
    %v2619 = vrcp.pop %v2592
    %v2620 = vmul.f32 1.0, %v2619
    %v2621 = vrcp.pop %v2593
    %v2622 = vmul.f32 1.0, %v2621
    %v2623 = vrcp.pop %v2594
    %v2624 = vmul.f32 1.0, %v2623
    %v2625 = vrcp.pop %v2595
    %v2626 = vmul.f32 1.0, %v2625
    %v2627 = vrcp.pop %v2596
    %v2628 = vmul.f32 1.0, %v2627
    %v2629 = vpack.c.bf16 %v2614, %v2598
    %v2630 = vpack.c.bf16 %v2616, %v2600
    %v2631 = vpack.c.bf16 %v2618, %v2602
    %v2632 = vpack.c.bf16 %v2620, %v2604
    %v2633 = vpack.c.bf16 %v2622, %v2606
    %v2634 = vpack.c.bf16 %v2624, %v2608
    %v2635 = vpack.c.bf16 %v2626, %v2610
    %v2636 = vpack.c.bf16 %v2628, %v2612
    %v2645 = vunpack.c.l.b16 %v2629
    %v2646 = vunpack.c.l.b16 %v2630
    %v2647 = vunpack.c.l.b16 %v2631
    %v2648 = vunpack.c.l.b16 %v2632
    %v2649 = vunpack.c.l.b16 %v2633
    %v2650 = vunpack.c.l.b16 %v2634
    %v2651 = vunpack.c.l.b16 %v2635
    %v2652 = vunpack.c.l.b16 %v2636
    %v2653 = vunpack.c.h.b16 %v2629
    %v2654 = vunpack.c.h.b16 %v2630
    %v2655 = vunpack.c.h.b16 %v2631
    %v2656 = vunpack.c.h.b16 %v2632
    %v2657 = vunpack.c.h.b16 %v2633
    %v2658 = vunpack.c.h.b16 %v2634
    %v2659 = vunpack.c.h.b16 %v2635
    %v2660 = vunpack.c.h.b16 %v2636
    %v2661 = vpack.c.b16 %v2646, %v2645
    %v2662 = vpack.c.b16 %v2648, %v2647
    %v2663 = vpack.c.b16 %v2650, %v2649
    %v2664 = vpack.c.b16 %v2652, %v2651
    %v2665 = vpack.c.b16 %v2654, %v2653
    %v2666 = vpack.c.b16 %v2656, %v2655
    %v2667 = vpack.c.b16 %v2658, %v2657
    %v2668 = vpack.c.b16 %v2660, %v2659
    %2677 = vst [vmem:[#allocation14] sm:$0xff] %v2661
    %2678 = vst [vmem:[#allocation14 + $0x8] sm:$0xff] %v2662
    %2679 = vst [vmem:[#allocation14 + $0x10] sm:$0xff] %v2663
    %2680 = vst [vmem:[#allocation14 + $0x18] sm:$0xff] %v2664
    %2681 = vst [vmem:[#allocation14 + $0x20] sm:$0xff] %v2665
    %2682 = vst [vmem:[#allocation14 + $0x28] sm:$0xff] %v2666
    %2683 = vst [vmem:[#allocation14 + $0x30] sm:$0xff] %v2667
    %2684 = vst [vmem:[#allocation14 + $0x38] sm:$0xff] %v2668
    // Predicated region
    $region66: #{tpu_custom_call.1} parent=1 // pred_check
      _
    $region67: #{tpu_custom_call.1} parent=1 // pred_check_branch
      %2686 = sbr.rel (0) target = $region69
    $region68: #{tpu_custom_call.1} parent=1 // pred_region
      %s2688 = ssub.s32 768, 768
      %2689 = vsyncadd [#allocation4], %s2688
      %s2690 = sshll.u32 [#allocation13], 4
      %s2691 = int_to_ptr.vmem [resolvable:$true] %s2690
      %2696 = dma.vmem_to_hbm [thread:$0]  %s2691, 768, %s10, [#allocation4], 384, 384, 24
    $region69: #{tpu_custom_call.1} parent=1 // pred_fallthru
      _
    // Predicated region
    $region70: #{tpu_custom_call.1} parent=1 // pred_check
      _
    $region71: #{tpu_custom_call.1} parent=1 // pred_check_branch
      %2698 = sbr.rel (0) target = $region73
    $region72: #{tpu_custom_call.1} parent=1 // pred_region
      %s2700 = ssub.s32 1024, 1024
      %2701 = vsyncadd [#allocation15], %s2700
      %s2702 = sshll.u32 [#allocation14], 4
      %s2703 = int_to_ptr.vmem [resolvable:$true] %s2702
      %2708 = dma.vmem_to_hbm [thread:$0]  %s2703, 1024, %s11, [#allocation15], 512, 512, 32
    $region73: #{tpu_custom_call.1} parent=1 // pred_fallthru
      _
    // Predicated region
    $region74: #{tpu_custom_call.1} parent=1 // pred_check
      _
    $region75: #{tpu_custom_call.1} parent=1 // pred_check_branch
      %2710 = sbr.rel (0) target = $region77
    $region76: #{tpu_custom_call.1} parent=1 // pred_region
      %2711 = dma.done [#allocation4], 768
    $region77: #{tpu_custom_call.1} parent=1 // pred_fallthru
      _
    // Predicated region
    $region78: #{tpu_custom_call.1} parent=1 // pred_check
      _
    $region79: #{tpu_custom_call.1} parent=1 // pred_check_branch
      %2713 = sbr.rel (0) target = $region81
    $region80: #{tpu_custom_call.1} parent=1 // pred_region
      %2714 = dma.done [#allocation15], 1024
    $region81: #{tpu_custom_call.1} parent=1 // pred_fallthru
      _
    %2715 = vsyncpa [#allocation3], 1
    %2716 = vsyncpa [#allocation6], 1
    %2717 = vsyncpa [#allocation9], 1
    %2718 = vsyncpa [#allocation12], 1
    %2719 = vsyncpa [#allocation4], 1
    %2720 = vsyncpa [#allocation15], 1

</llo_original>
